<compile_context>
chip_gen: v7x
topology: tpu7x:2x2x1
jax: 0.10.0
libtpu: 0.0.40
codegen_flags: <defaults>
</compile_context>

<pallas_src>
import functools

import jax
import jax.numpy as jnp
from jax import lax
from jax.experimental import pallas as pl
from jax.experimental.pallas import tpu as pltpu


NUM_RELATIONS = 5
VMEM_SPEC = pl.BlockSpec(memory_space=pltpu.MemorySpace.VMEM)
ANY_SPEC = pl.BlockSpec(memory_space=pl.ANY)


# ----------------------------------------------------------------------------
# Kernel 1: fused RGCN stack + global_max_pool (+ optional fc_g1/fc_g2)
# ----------------------------------------------------------------------------
def _rgcn_stack_kernel(x_ref, adj_ref, oh_ref,
                       w1_ref, b1_ref, w2_ref, b2_ref, w3_ref, b3_ref,
                       fc1w_ref, fc1b_ref, fc2w_ref, fc2b_ref,
                       o_ref, *, num_relations, douts, use_fc):
    R = num_relations
    adj = adj_ref[...]                                     # [R, N, N], hoisted

    def layer(x, w_ref, b_ref, dout):
        # one MXU launch for [root | W_0 .. W_{R-1}]
        xw = jnp.dot(x, w_ref[...],
                     preferred_element_type=jnp.float32)   # [N, (R+1)*dout]
        acc = xw[:, :dout] + b_ref[...]                    # self transform + bias
        for r in range(R):                                 # mean-aggregated messages
            acc = acc + jnp.dot(adj[r], xw[:, (r + 1) * dout:(r + 2) * dout],
                                preferred_element_type=jnp.float32)
        return jnp.tanh(acc)

    x = layer(x_ref[...], w1_ref, b1_ref, douts[0])
    x = layer(x, w2_ref, b2_ref, douts[1])
    x = layer(x, w3_ref, b3_ref, douts[2])                 # [N, dout3]

    # global_max_pool fused here: x is already resident in VMEM.
    oh = oh_ref[...]                                       # [G, N, 1]
    vals = jnp.where(oh > 0, x[None, :, :], jnp.float32(-1e30))
    pooled = jnp.max(vals, axis=1)                         # [G, dout3]
    counts = jnp.sum(oh, axis=1)                           # [G, 1]
    pooled = jnp.where(counts > 0, pooled, 0.0)            # guard empty graphs

    if use_fc:
        nt = (((1,), (1,)), ((), ()))                      # x @ W.T
        pooled = jnp.maximum(
            lax.dot_general(pooled, fc1w_ref[...], nt,
                            preferred_element_type=jnp.float32) + fc1b_ref[...],
            0.0)
        pooled = lax.dot_general(pooled, fc2w_ref[...], nt,
                                 preferred_element_type=jnp.float32) + fc2b_ref[...]

    o_ref[...] = pooled                                    # single lane-dense store


def rgcn_stack(x, adj, onehot3d, layers, fc1, fc2, *, use_fc):
    num_graphs = onehot3d.shape[0]
    dout = layers[-1]['dout']
    kernel = functools.partial(
        _rgcn_stack_kernel,
        num_relations=adj.shape[0],
        douts=tuple(l['dout'] for l in layers),
        use_fc=use_fc)
    return pl.pallas_call(
        kernel,
        out_shape=jax.ShapeDtypeStruct((num_graphs, dout), jnp.float32),
        in_specs=[VMEM_SPEC] * 13,
        out_specs=VMEM_SPEC,
    )(x, adj, onehot3d,
      layers[0]['w_full'], layers[0]['bias2d'],
      layers[1]['w_full'], layers[1]['bias2d'],
      layers[2]['w_full'], layers[2]['bias2d'],
      fc1['w'], fc1['b2d'], fc2['w'], fc2['b2d'])


# ----------------------------------------------------------------------------
# Kernel 2: fused GAT stack (+ optional fc_g3/fc_g4) + final (x*scale) @ x_e.T
#           with manual bf16 weight prefetch from HBM.
# ----------------------------------------------------------------------------
def _gat_stack_kernel(x_ref, adj_ref,
                      asrc1_ref, adst1_ref, bias1_ref,
                      asrc2_ref, adst2_ref, bias2_ref,
                      asrc3_ref, adst3_ref, bias3_ref,
                      fc3w_ref, fc3b_ref, fc4w_ref, fc4b_ref,
                      xg_ref, scale_ref,
                      w1_hbm, w2_hbm, w3_hbm,
                      xe_ref, xc_ref,
                      w1_buf, w2_buf, w3_buf, sem,
                      *, head_cfg, use_fc):
    # Issue all projection-weight DMAs up front; layer-2/3 copies overlap with
    # layer-1/2 compute (P4-style manual prefetch).
    cp1 = pltpu.make_async_copy(w1_hbm, w1_buf, sem.at[0])
    cp2 = pltpu.make_async_copy(w2_hbm, w2_buf, sem.at[1])
    cp3 = pltpu.make_async_copy(w3_hbm, w3_buf, sem.at[2])
    cp1.start()
    cp2.start()
    cp3.start()

    adj = adj_ref[...]                                     # [Ne, Ne] 0/1 (+ self loops)
    nt = (((1,), (1,)), ((), ()))

    def gat_layer(x, w_buf, asrc_ref, adst_ref, bias_ref, heads, dh):
        # bf16 projection (bf16 MXU path, halved weight DMA), f32 accumulate.
        h_all = jnp.dot(x.astype(jnp.bfloat16), w_buf[...],
                        preferred_element_type=jnp.float32)       # [Ne, H*dh]
        # All-head attention coefficients in two matmuls (block matrices).
        a_dst = jnp.dot(h_all, adst_ref[...],
                        preferred_element_type=jnp.float32)       # [Ne, H]
        a_src_t = lax.dot_general(asrc_ref[...], h_all, nt,
                                  preferred_element_type=jnp.float32)  # [H, Ne]
        outs = []
        for hd in range(heads):
            e = a_dst[:, hd:hd + 1] + a_src_t[hd:hd + 1, :]       # [Ne, Ne]
            e = jnp.where(e > 0, e, 0.2 * e)                      # LeakyReLU(0.2)
            e = e - jnp.max(e, axis=-1, keepdims=True)
            p = jnp.exp(e) * adj                                  # mask by multiply
            alpha = p * pl.reciprocal(jnp.sum(p, axis=-1, keepdims=True),
                                      approx=True)
            outs.append(jnp.dot(alpha, h_all[:, hd * dh:(hd + 1) * dh],
                                preferred_element_type=jnp.float32))
        out = outs[0] if heads == 1 else jnp.concatenate(outs, axis=-1)
        return jnp.maximum(out + bias_ref[...], 0.0)              # + bias, ReLU

    cp1.wait()
    x = gat_layer(x_ref[...], w1_buf, asrc1_ref, adst1_ref, bias1_ref,
                  head_cfg[0][0], head_cfg[0][1])
    cp2.wait()
    x = gat_layer(x, w2_buf, asrc2_ref, adst2_ref, bias2_ref,
                  head_cfg[1][0], head_cfg[1][1])
    cp3.wait()
    x = gat_layer(x, w3_buf, asrc3_ref, adst3_ref, bias3_ref,
                  head_cfg[2][0], head_cfg[2][1])

    if use_fc:
        x = jnp.maximum(
            lax.dot_general(x, fc3w_ref[...], nt,
                            preferred_element_type=jnp.float32) + fc3b_ref[...],
            0.0)
        x = lax.dot_general(x, fc4w_ref[...], nt,
                            preferred_element_type=jnp.float32) + fc4b_ref[...]

    xe_ref[...] = x                                        # [Ne, 64]
    xg = xg_ref[...] * scale_ref[...]                      # DiagLayer (or ones)
    xc_ref[...] = lax.dot_general(xg, x, nt,
                                  preferred_element_type=jnp.float32)  # [G, Ne]


def gat_stack(x_e, adj_e, layers, fc3, fc4, x_pooled, scale, *, use_fc):
    num_e = x_e.shape[0]
    num_graphs = x_pooled.shape[0]
    head_cfg = tuple((l['heads'], l['dh']) for l in layers)
    dout_e = layers[-1]['heads'] * layers[-1]['dh']
    kernel = functools.partial(_gat_stack_kernel, head_cfg=head_cfg, use_fc=use_fc)
    return pl.pallas_call(
        kernel,
        out_shape=(jax.ShapeDtypeStruct((num_e, dout_e), jnp.float32),
                   jax.ShapeDtypeStruct((num_graphs, num_e), jnp.float32)),
        in_specs=[VMEM_SPEC] * 17 + [ANY_SPEC] * 3,
        out_specs=(VMEM_SPEC, VMEM_SPEC),
        scratch_shapes=[
            pltpu.VMEM(layers[0]['w_bf16'].shape, jnp.bfloat16),
            pltpu.VMEM(layers[1]['w_bf16'].shape, jnp.bfloat16),
            pltpu.VMEM(layers[2]['w_bf16'].shape, jnp.bfloat16),
            pltpu.SemaphoreType.DMA((3,)),
        ],
    )(x_e, adj_e,
      layers[0]['asrc_bd'], layers[0]['adst_bd'], layers[0]['bias'],
      layers[1]['asrc_bd'], layers[1]['adst_bd'], layers[1]['bias'],
      layers[2]['asrc_bd'], layers[2]['adst_bd'], layers[2]['bias'],
      fc3['w'], fc3['b2d'], fc4['w'], fc4['b2d'],
      x_pooled, scale,
      layers[0]['w_bf16'], layers[1]['w_bf16'], layers[2]['w_bf16'])


# ----------------------------------------------------------------------------
# Glue: dense adjacency construction from edge lists (scatter, plain JAX)
# ----------------------------------------------------------------------------
def build_rel_adj(edge_index, edge_type, num_nodes, num_relations):
    """Row-normalized per-relation adjacency (RGCNConv aggr='mean')."""
    src, dst = edge_index[0], edge_index[1]
    adj = jnp.zeros((num_relations, num_nodes, num_nodes), jnp.float32)
    adj = adj.at[edge_type, dst, src].add(1.0)
    deg = jnp.sum(adj, axis=-1, keepdims=True)
    return adj / jnp.where(deg > 0, deg, 1.0)


def build_gat_adj(edge_index, num_nodes):
    """Adjacency presence mask with self loops (GATConv add_self_loops=True)."""
    src, dst = edge_index[0], edge_index[1]
    adj = jnp.zeros((num_nodes, num_nodes), jnp.float32)
    adj = adj.at[dst, src].set(1.0)
    return jnp.maximum(adj, jnp.eye(num_nodes, dtype=jnp.float32))


# ----------------------------------------------------------------------------
# Deterministic parameter initialization (shapes from RGCN.__init__), already
# laid out in the fused-kernel format.
# ----------------------------------------------------------------------------
def _nrm(key, shape, std):
    return (std * jax.random.normal(key, shape)).astype(jnp.float32)


def init_rgcn_conv(key, din, dout, num_rel=NUM_RELATIONS, num_bases=4):
    k1, k2, k3, k4 = jax.random.split(key, 4)
    basis = _nrm(k1, (num_bases, din, dout), 1.0 / jnp.sqrt(din))
    comp = _nrm(k2, (num_rel, num_bases), 0.5)
    w = jnp.einsum('rb,bio->rio', comp, basis)            # basis decomposition
    root = _nrm(k3, (din, dout), 1.0 / jnp.sqrt(din))
    bias = _nrm(k4, (dout,), 0.1)
    # fused weight: [din, (R+1)*dout]; block 0 = root, block r+1 = W_r
    w_full = jnp.concatenate([root[None], w], axis=0)
    w_full = w_full.transpose(1, 0, 2).reshape(din, (num_rel + 1) * dout)
    return dict(w_full=w_full, bias2d=bias.reshape(1, -1), dout=dout)


def init_gat_conv(key, din, dout, heads):
    k1, k2, k3, k4 = jax.random.split(key, 4)
    w = _nrm(k1, (din, heads * dout), 1.0 / jnp.sqrt(din))
    att_src = _nrm(k2, (heads, dout), 0.3)
    att_dst = _nrm(k3, (heads, dout), 0.3)
    bias = _nrm(k4, (1, heads * dout), 0.1)
    eye = jnp.eye(heads, dtype=jnp.float32)
    # [H, H*dh]: row h carries att_src[h] in columns [h*dh, (h+1)*dh)
    asrc_bd = (eye[:, :, None] * att_src[None, :, :]).reshape(heads, heads * dout)
    # [H*dh, H]: column h carries att_dst[h] in rows [h*dh, (h+1)*dh)
    adst_bd = (att_dst[:, :, None] * eye[:, None, :]).reshape(heads * dout, heads)
    return dict(w_bf16=w.astype(jnp.bfloat16), asrc_bd=asrc_bd, adst_bd=adst_bd,
                bias=bias, heads=heads, dh=dout)


def init_linear(key, din, dout):
    k1, k2 = jax.random.split(key)
    return dict(w=_nrm(k1, (dout, din), 1.0 / jnp.sqrt(din)),
                b2d=_nrm(k2, (dout,), 0.1).reshape(1, -1))


def init_params(key, input_dim=109, input_dim_e=243, output_dim=64, heads=10):
    ks = jax.random.split(key, 12)
    return dict(
        rgcn1=init_rgcn_conv(ks[0], input_dim, 128),
        rgcn2=init_rgcn_conv(ks[1], 128, 64),
        rgcn3=init_rgcn_conv(ks[2], 64, output_dim),
        gat1=init_gat_conv(ks[3], input_dim_e, 128, heads),
        gat2=init_gat_conv(ks[4], 128 * heads, output_dim, heads),
        gat3=init_gat_conv(ks[5], output_dim * heads, output_dim, 1),
        fc_g1=init_linear(ks[6], output_dim, output_dim),
        fc_g2=init_linear(ks[7], output_dim, output_dim),
        fc_g3=init_linear(ks[8], output_dim, output_dim),
        fc_g4=init_linear(ks[9], output_dim, output_dim),
        diag_w=_nrm(ks[10], (1, output_dim), 1.0 / jnp.sqrt(output_dim)),
    )


# ----------------------------------------------------------------------------
# Forward pass (inference: dropout layers are identity)
# ----------------------------------------------------------------------------
def rgcn_forward(params, x, edge_index, edge_type, batch, num_graphs,
                 x_e, edge_index_e, DF=False, not_FC=True):
    use_fc = not not_FC

    adj = build_rel_adj(edge_index, edge_type, x.shape[0], NUM_RELATIONS)
    onehot3d = (batch[None, :, None]
                == jnp.arange(num_graphs, dtype=batch.dtype)[:, None, None]
                ).astype(jnp.float32)                      # [G, N, 1]

    x_g = rgcn_stack(x, adj, onehot3d,
                     [params['rgcn1'], params['rgcn2'], params['rgcn3']],
                     params['fc_g1'], params['fc_g2'], use_fc=use_fc)   # [G, 64]

    adj_e = build_gat_adj(edge_index_e, x_e.shape[0])
    scale = params['diag_w'] if DF else jnp.ones((1, x_g.shape[1]), jnp.float32)

    x_e_out, xc = gat_stack(x_e, adj_e,
                            [params['gat1'], params['gat2'], params['gat3']],
                            params['fc_g3'], params['fc_g4'],
                            x_g, scale, use_fc=use_fc)
    return xc, x_g, x_e_out


# ----------------------------------------------------------------------------
if __name__ == "__main__":
    key = jax.random.PRNGKey(0)
    kp, kx, ke, kt, kxe, kee = jax.random.split(key, 6)

    # small synthetic graphs; feature dims fixed by the module definition
    N, E, G = 24, 64, 3          # drug graph: 24 nodes, 64 edges, 3 graphs in batch
    Ne, Ee = 12, 36              # entity graph: 12 nodes, 36 edges

    x = jax.random.normal(kx, (N, 109), dtype=jnp.float32)
    edge_index = jax.random.randint(ke, (2, E), 0, N)
    edge_type = jax.random.randint(kt, (E,), 0, NUM_RELATIONS)
    batch = jnp.repeat(jnp.arange(G, dtype=jnp.int32), N // G)

    x_e = jax.random.normal(kxe, (Ne, 243), dtype=jnp.float32)
    edge_index_e = jax.random.randint(kee, (2, Ee), 0, Ne)

    params = init_params(kp)

    xc, x_out, x_e_out = rgcn_forward(params, x, edge_index, edge_type, batch,
                                      G, x_e, edge_index_e,
                                      DF=False, not_FC=True)
    jax.block_until_ready((xc, x_out, x_e_out))

    assert xc.shape == (G, Ne)
    assert x_out.shape == (G, 64)
    assert x_e_out.shape == (Ne, 64)
    assert bool(jnp.all(jnp.isfinite(xc)))
    print("KERNEL_OK")
</pallas_src>

<mosaic_0001>
module attributes {stable_mosaic.version = 11 : i64} {
  func.func @_rgcn_stack_kernel(%arg0: memref<24x109xf32, #tpu.memory_space<vmem>>, %arg1: memref<5x24x24xf32, #tpu.memory_space<vmem>>, %arg2: memref<3x24x1xf32, #tpu.memory_space<vmem>>, %arg3: memref<109x768xf32, #tpu.memory_space<vmem>>, %arg4: memref<1x128xf32, #tpu.memory_space<vmem>>, %arg5: memref<128x384xf32, #tpu.memory_space<vmem>>, %arg6: memref<1x64xf32, #tpu.memory_space<vmem>>, %arg7: memref<64x384xf32, #tpu.memory_space<vmem>>, %arg8: memref<1x64xf32, #tpu.memory_space<vmem>>, %arg9: memref<64x64xf32, #tpu.memory_space<vmem>>, %arg10: memref<1x64xf32, #tpu.memory_space<vmem>>, %arg11: memref<64x64xf32, #tpu.memory_space<vmem>>, %arg12: memref<1x64xf32, #tpu.memory_space<vmem>>, %arg13: memref<3x64xf32, #tpu.memory_space<vmem>>) attributes {dimension_semantics = [], scalar_prefetch = 0 : i64, scratch_operands = 0 : i64, tpu.core_type = #tpu.core_type<tc>} {
    %c0 = arith.constant 0 : index
    %c0_0 = arith.constant 0 : index
    %c0_1 = arith.constant 0 : index
    %0 = vector.load %arg1[%c0, %c0_0, %c0_1] : memref<5x24x24xf32, #tpu.memory_space<vmem>>, vector<5x24x24xf32>
    %c0_2 = arith.constant 0 : index
    %c0_3 = arith.constant 0 : index
    %1 = vector.load %arg0[%c0_2, %c0_3] : memref<24x109xf32, #tpu.memory_space<vmem>>, vector<24x109xf32>
    %c0_4 = arith.constant 0 : index
    %c0_5 = arith.constant 0 : index
    %2 = vector.load %arg3[%c0_4, %c0_5] : memref<109x768xf32, #tpu.memory_space<vmem>>, vector<109x768xf32>
    %cst = arith.constant dense<0.000000e+00> : vector<24x768xf32>
    %3 = tpu.matmul %1, %2, %cst {dimension_numbers = #tpu.dot_dimension_numbers<[1], [0], [0], [1], [0, 0, 1, 1], [], []>} : vector<24x109xf32>, vector<109x768xf32>, vector<24x768xf32> -> vector<24x768xf32>
    %4 = vector.extract_strided_slice %3 {offsets = [0, 0], sizes = [24, 128], strides = [1, 1]} : vector<24x768xf32> to vector<24x128xf32>
    %c0_6 = arith.constant 0 : index
    %c0_7 = arith.constant 0 : index
    %5 = vector.load %arg4[%c0_6, %c0_7] : memref<1x128xf32, #tpu.memory_space<vmem>>, vector<1x128xf32>
    %6 = vector.broadcast %5 : vector<1x128xf32> to vector<24x128xf32>
    %7 = arith.addf %4, %6 : vector<24x128xf32>
    %8 = vector.extract_strided_slice %0 {offsets = [0, 0, 0], sizes = [1, 24, 24], strides = [1, 1, 1]} : vector<5x24x24xf32> to vector<1x24x24xf32>
    %9 = vector.shape_cast %8 : vector<1x24x24xf32> to vector<24x24xf32>
    %10 = vector.extract_strided_slice %3 {offsets = [0, 128], sizes = [24, 128], strides = [1, 1]} : vector<24x768xf32> to vector<24x128xf32>
    %cst_8 = arith.constant dense<0.000000e+00> : vector<24x128xf32>
    %11 = tpu.matmul %9, %10, %cst_8 {dimension_numbers = #tpu.dot_dimension_numbers<[1], [0], [0], [1], [0, 0, 1, 1], [], []>} : vector<24x24xf32>, vector<24x128xf32>, vector<24x128xf32> -> vector<24x128xf32>
    %12 = arith.addf %7, %11 : vector<24x128xf32>
    %13 = vector.extract_strided_slice %0 {offsets = [1, 0, 0], sizes = [1, 24, 24], strides = [1, 1, 1]} : vector<5x24x24xf32> to vector<1x24x24xf32>
    %14 = vector.shape_cast %13 : vector<1x24x24xf32> to vector<24x24xf32>
    %15 = vector.extract_strided_slice %3 {offsets = [0, 256], sizes = [24, 128], strides = [1, 1]} : vector<24x768xf32> to vector<24x128xf32>
    %cst_9 = arith.constant dense<0.000000e+00> : vector<24x128xf32>
    %16 = tpu.matmul %14, %15, %cst_9 {dimension_numbers = #tpu.dot_dimension_numbers<[1], [0], [0], [1], [0, 0, 1, 1], [], []>} : vector<24x24xf32>, vector<24x128xf32>, vector<24x128xf32> -> vector<24x128xf32>
    %17 = arith.addf %12, %16 : vector<24x128xf32>
    %18 = vector.extract_strided_slice %0 {offsets = [2, 0, 0], sizes = [1, 24, 24], strides = [1, 1, 1]} : vector<5x24x24xf32> to vector<1x24x24xf32>
    %19 = vector.shape_cast %18 : vector<1x24x24xf32> to vector<24x24xf32>
    %20 = vector.extract_strided_slice %3 {offsets = [0, 384], sizes = [24, 128], strides = [1, 1]} : vector<24x768xf32> to vector<24x128xf32>
    %cst_10 = arith.constant dense<0.000000e+00> : vector<24x128xf32>
    %21 = tpu.matmul %19, %20, %cst_10 {dimension_numbers = #tpu.dot_dimension_numbers<[1], [0], [0], [1], [0, 0, 1, 1], [], []>} : vector<24x24xf32>, vector<24x128xf32>, vector<24x128xf32> -> vector<24x128xf32>
    %22 = arith.addf %17, %21 : vector<24x128xf32>
    %23 = vector.extract_strided_slice %0 {offsets = [3, 0, 0], sizes = [1, 24, 24], strides = [1, 1, 1]} : vector<5x24x24xf32> to vector<1x24x24xf32>
    %24 = vector.shape_cast %23 : vector<1x24x24xf32> to vector<24x24xf32>
    %25 = vector.extract_strided_slice %3 {offsets = [0, 512], sizes = [24, 128], strides = [1, 1]} : vector<24x768xf32> to vector<24x128xf32>
    %cst_11 = arith.constant dense<0.000000e+00> : vector<24x128xf32>
    %26 = tpu.matmul %24, %25, %cst_11 {dimension_numbers = #tpu.dot_dimension_numbers<[1], [0], [0], [1], [0, 0, 1, 1], [], []>} : vector<24x24xf32>, vector<24x128xf32>, vector<24x128xf32> -> vector<24x128xf32>
    %27 = arith.addf %22, %26 : vector<24x128xf32>
    %28 = vector.extract_strided_slice %0 {offsets = [4, 0, 0], sizes = [1, 24, 24], strides = [1, 1, 1]} : vector<5x24x24xf32> to vector<1x24x24xf32>
    %29 = vector.shape_cast %28 : vector<1x24x24xf32> to vector<24x24xf32>
    %30 = vector.extract_strided_slice %3 {offsets = [0, 640], sizes = [24, 128], strides = [1, 1]} : vector<24x768xf32> to vector<24x128xf32>
    %cst_12 = arith.constant dense<0.000000e+00> : vector<24x128xf32>
    %31 = tpu.matmul %29, %30, %cst_12 {dimension_numbers = #tpu.dot_dimension_numbers<[1], [0], [0], [1], [0, 0, 1, 1], [], []>} : vector<24x24xf32>, vector<24x128xf32>, vector<24x128xf32> -> vector<24x128xf32>
    %32 = arith.addf %27, %31 : vector<24x128xf32>
    %33 = math.tanh %32 : vector<24x128xf32>
    %c0_13 = arith.constant 0 : index
    %c0_14 = arith.constant 0 : index
    %34 = vector.load %arg5[%c0_13, %c0_14] : memref<128x384xf32, #tpu.memory_space<vmem>>, vector<128x384xf32>
    %cst_15 = arith.constant dense<0.000000e+00> : vector<24x384xf32>
    %35 = tpu.matmul %33, %34, %cst_15 {dimension_numbers = #tpu.dot_dimension_numbers<[1], [0], [0], [1], [0, 0, 1, 1], [], []>} : vector<24x128xf32>, vector<128x384xf32>, vector<24x384xf32> -> vector<24x384xf32>
    %36 = vector.extract_strided_slice %35 {offsets = [0, 0], sizes = [24, 64], strides = [1, 1]} : vector<24x384xf32> to vector<24x64xf32>
    %c0_16 = arith.constant 0 : index
    %c0_17 = arith.constant 0 : index
    %37 = vector.load %arg6[%c0_16, %c0_17] : memref<1x64xf32, #tpu.memory_space<vmem>>, vector<1x64xf32>
    %38 = vector.broadcast %37 : vector<1x64xf32> to vector<24x64xf32>
    %39 = arith.addf %36, %38 : vector<24x64xf32>
    %40 = vector.extract_strided_slice %0 {offsets = [0, 0, 0], sizes = [1, 24, 24], strides = [1, 1, 1]} : vector<5x24x24xf32> to vector<1x24x24xf32>
    %41 = vector.shape_cast %40 : vector<1x24x24xf32> to vector<24x24xf32>
    %42 = vector.extract_strided_slice %35 {offsets = [0, 64], sizes = [24, 64], strides = [1, 1]} : vector<24x384xf32> to vector<24x64xf32>
    %cst_18 = arith.constant dense<0.000000e+00> : vector<24x64xf32>
    %43 = tpu.matmul %41, %42, %cst_18 {dimension_numbers = #tpu.dot_dimension_numbers<[1], [0], [0], [1], [0, 0, 1, 1], [], []>} : vector<24x24xf32>, vector<24x64xf32>, vector<24x64xf32> -> vector<24x64xf32>
    %44 = arith.addf %39, %43 : vector<24x64xf32>
    %45 = vector.extract_strided_slice %0 {offsets = [1, 0, 0], sizes = [1, 24, 24], strides = [1, 1, 1]} : vector<5x24x24xf32> to vector<1x24x24xf32>
    %46 = vector.shape_cast %45 : vector<1x24x24xf32> to vector<24x24xf32>
    %47 = vector.extract_strided_slice %35 {offsets = [0, 128], sizes = [24, 64], strides = [1, 1]} : vector<24x384xf32> to vector<24x64xf32>
    %cst_19 = arith.constant dense<0.000000e+00> : vector<24x64xf32>
    %48 = tpu.matmul %46, %47, %cst_19 {dimension_numbers = #tpu.dot_dimension_numbers<[1], [0], [0], [1], [0, 0, 1, 1], [], []>} : vector<24x24xf32>, vector<24x64xf32>, vector<24x64xf32> -> vector<24x64xf32>
    %49 = arith.addf %44, %48 : vector<24x64xf32>
    %50 = vector.extract_strided_slice %0 {offsets = [2, 0, 0], sizes = [1, 24, 24], strides = [1, 1, 1]} : vector<5x24x24xf32> to vector<1x24x24xf32>
    %51 = vector.shape_cast %50 : vector<1x24x24xf32> to vector<24x24xf32>
    %52 = vector.extract_strided_slice %35 {offsets = [0, 192], sizes = [24, 64], strides = [1, 1]} : vector<24x384xf32> to vector<24x64xf32>
    %cst_20 = arith.constant dense<0.000000e+00> : vector<24x64xf32>
    %53 = tpu.matmul %51, %52, %cst_20 {dimension_numbers = #tpu.dot_dimension_numbers<[1], [0], [0], [1], [0, 0, 1, 1], [], []>} : vector<24x24xf32>, vector<24x64xf32>, vector<24x64xf32> -> vector<24x64xf32>
    %54 = arith.addf %49, %53 : vector<24x64xf32>
    %55 = vector.extract_strided_slice %0 {offsets = [3, 0, 0], sizes = [1, 24, 24], strides = [1, 1, 1]} : vector<5x24x24xf32> to vector<1x24x24xf32>
    %56 = vector.shape_cast %55 : vector<1x24x24xf32> to vector<24x24xf32>
    %57 = vector.extract_strided_slice %35 {offsets = [0, 256], sizes = [24, 64], strides = [1, 1]} : vector<24x384xf32> to vector<24x64xf32>
    %cst_21 = arith.constant dense<0.000000e+00> : vector<24x64xf32>
    %58 = tpu.matmul %56, %57, %cst_21 {dimension_numbers = #tpu.dot_dimension_numbers<[1], [0], [0], [1], [0, 0, 1, 1], [], []>} : vector<24x24xf32>, vector<24x64xf32>, vector<24x64xf32> -> vector<24x64xf32>
    %59 = arith.addf %54, %58 : vector<24x64xf32>
    %60 = vector.extract_strided_slice %0 {offsets = [4, 0, 0], sizes = [1, 24, 24], strides = [1, 1, 1]} : vector<5x24x24xf32> to vector<1x24x24xf32>
    %61 = vector.shape_cast %60 : vector<1x24x24xf32> to vector<24x24xf32>
    %62 = vector.extract_strided_slice %35 {offsets = [0, 320], sizes = [24, 64], strides = [1, 1]} : vector<24x384xf32> to vector<24x64xf32>
    %cst_22 = arith.constant dense<0.000000e+00> : vector<24x64xf32>
    %63 = tpu.matmul %61, %62, %cst_22 {dimension_numbers = #tpu.dot_dimension_numbers<[1], [0], [0], [1], [0, 0, 1, 1], [], []>} : vector<24x24xf32>, vector<24x64xf32>, vector<24x64xf32> -> vector<24x64xf32>
    %64 = arith.addf %59, %63 : vector<24x64xf32>
    %65 = math.tanh %64 : vector<24x64xf32>
    %c0_23 = arith.constant 0 : index
    %c0_24 = arith.constant 0 : index
    %66 = vector.load %arg7[%c0_23, %c0_24] : memref<64x384xf32, #tpu.memory_space<vmem>>, vector<64x384xf32>
    %cst_25 = arith.constant dense<0.000000e+00> : vector<24x384xf32>
    %67 = tpu.matmul %65, %66, %cst_25 {dimension_numbers = #tpu.dot_dimension_numbers<[1], [0], [0], [1], [0, 0, 1, 1], [], []>} : vector<24x64xf32>, vector<64x384xf32>, vector<24x384xf32> -> vector<24x384xf32>
    %68 = vector.extract_strided_slice %67 {offsets = [0, 0], sizes = [24, 64], strides = [1, 1]} : vector<24x384xf32> to vector<24x64xf32>
    %c0_26 = arith.constant 0 : index
    %c0_27 = arith.constant 0 : index
    %69 = vector.load %arg8[%c0_26, %c0_27] : memref<1x64xf32, #tpu.memory_space<vmem>>, vector<1x64xf32>
    %70 = vector.broadcast %69 : vector<1x64xf32> to vector<24x64xf32>
    %71 = arith.addf %68, %70 : vector<24x64xf32>
    %72 = vector.extract_strided_slice %0 {offsets = [0, 0, 0], sizes = [1, 24, 24], strides = [1, 1, 1]} : vector<5x24x24xf32> to vector<1x24x24xf32>
    %73 = vector.shape_cast %72 : vector<1x24x24xf32> to vector<24x24xf32>
    %74 = vector.extract_strided_slice %67 {offsets = [0, 64], sizes = [24, 64], strides = [1, 1]} : vector<24x384xf32> to vector<24x64xf32>
    %cst_28 = arith.constant dense<0.000000e+00> : vector<24x64xf32>
    %75 = tpu.matmul %73, %74, %cst_28 {dimension_numbers = #tpu.dot_dimension_numbers<[1], [0], [0], [1], [0, 0, 1, 1], [], []>} : vector<24x24xf32>, vector<24x64xf32>, vector<24x64xf32> -> vector<24x64xf32>
    %76 = arith.addf %71, %75 : vector<24x64xf32>
    %77 = vector.extract_strided_slice %0 {offsets = [1, 0, 0], sizes = [1, 24, 24], strides = [1, 1, 1]} : vector<5x24x24xf32> to vector<1x24x24xf32>
    %78 = vector.shape_cast %77 : vector<1x24x24xf32> to vector<24x24xf32>
    %79 = vector.extract_strided_slice %67 {offsets = [0, 128], sizes = [24, 64], strides = [1, 1]} : vector<24x384xf32> to vector<24x64xf32>
    %cst_29 = arith.constant dense<0.000000e+00> : vector<24x64xf32>
    %80 = tpu.matmul %78, %79, %cst_29 {dimension_numbers = #tpu.dot_dimension_numbers<[1], [0], [0], [1], [0, 0, 1, 1], [], []>} : vector<24x24xf32>, vector<24x64xf32>, vector<24x64xf32> -> vector<24x64xf32>
    %81 = arith.addf %76, %80 : vector<24x64xf32>
    %82 = vector.extract_strided_slice %0 {offsets = [2, 0, 0], sizes = [1, 24, 24], strides = [1, 1, 1]} : vector<5x24x24xf32> to vector<1x24x24xf32>
    %83 = vector.shape_cast %82 : vector<1x24x24xf32> to vector<24x24xf32>
    %84 = vector.extract_strided_slice %67 {offsets = [0, 192], sizes = [24, 64], strides = [1, 1]} : vector<24x384xf32> to vector<24x64xf32>
    %cst_30 = arith.constant dense<0.000000e+00> : vector<24x64xf32>
    %85 = tpu.matmul %83, %84, %cst_30 {dimension_numbers = #tpu.dot_dimension_numbers<[1], [0], [0], [1], [0, 0, 1, 1], [], []>} : vector<24x24xf32>, vector<24x64xf32>, vector<24x64xf32> -> vector<24x64xf32>
    %86 = arith.addf %81, %85 : vector<24x64xf32>
    %87 = vector.extract_strided_slice %0 {offsets = [3, 0, 0], sizes = [1, 24, 24], strides = [1, 1, 1]} : vector<5x24x24xf32> to vector<1x24x24xf32>
    %88 = vector.shape_cast %87 : vector<1x24x24xf32> to vector<24x24xf32>
    %89 = vector.extract_strided_slice %67 {offsets = [0, 256], sizes = [24, 64], strides = [1, 1]} : vector<24x384xf32> to vector<24x64xf32>
    %cst_31 = arith.constant dense<0.000000e+00> : vector<24x64xf32>
    %90 = tpu.matmul %88, %89, %cst_31 {dimension_numbers = #tpu.dot_dimension_numbers<[1], [0], [0], [1], [0, 0, 1, 1], [], []>} : vector<24x24xf32>, vector<24x64xf32>, vector<24x64xf32> -> vector<24x64xf32>
    %91 = arith.addf %86, %90 : vector<24x64xf32>
    %92 = vector.extract_strided_slice %0 {offsets = [4, 0, 0], sizes = [1, 24, 24], strides = [1, 1, 1]} : vector<5x24x24xf32> to vector<1x24x24xf32>
    %93 = vector.shape_cast %92 : vector<1x24x24xf32> to vector<24x24xf32>
    %94 = vector.extract_strided_slice %67 {offsets = [0, 320], sizes = [24, 64], strides = [1, 1]} : vector<24x384xf32> to vector<24x64xf32>
    %cst_32 = arith.constant dense<0.000000e+00> : vector<24x64xf32>
    %95 = tpu.matmul %93, %94, %cst_32 {dimension_numbers = #tpu.dot_dimension_numbers<[1], [0], [0], [1], [0, 0, 1, 1], [], []>} : vector<24x24xf32>, vector<24x64xf32>, vector<24x64xf32> -> vector<24x64xf32>
    %96 = arith.addf %91, %95 : vector<24x64xf32>
    %97 = math.tanh %96 : vector<24x64xf32>
    %c0_33 = arith.constant 0 : index
    %c0_34 = arith.constant 0 : index
    %c0_35 = arith.constant 0 : index
    %98 = vector.load %arg2[%c0_33, %c0_34, %c0_35] : memref<3x24x1xf32, #tpu.memory_space<vmem>>, vector<3x24x1xf32>
    %cst_36 = arith.constant 0.000000e+00 : f32
    %99 = vector.broadcast %cst_36 : f32 to vector<3x24x1xf32>
    %100 = arith.cmpf ogt, %98, %99 : vector<3x24x1xf32>
    %101 = vector.shape_cast %97 : vector<24x64xf32> to vector<1x24x64xf32>
    %cst_37 = arith.constant -1.000000e+30 : f32
    %102 = vector.shape_cast %100 : vector<3x24x1xi1> to vector<3x24x1xi1>
    %103 = vector.broadcast %102 : vector<3x24x1xi1> to vector<3x24x64xi1>
    %104 = vector.shape_cast %101 : vector<1x24x64xf32> to vector<1x24x64xf32>
    %105 = vector.broadcast %104 : vector<1x24x64xf32> to vector<3x24x64xf32>
    %106 = vector.broadcast %cst_37 : f32 to vector<3x24x64xf32>
    %107 = arith.select %103, %105, %106 : vector<3x24x64xi1>, vector<3x24x64xf32>
    %cst_38 = arith.constant dense<0xFF800000> : vector<3x64xf32>
    %108 = vector.multi_reduction <maximumf>, %107, %cst_38 [1] : vector<3x24x64xf32> to vector<3x64xf32>
    %cst_39 = arith.constant dense<0.000000e+00> : vector<3x1xf32>
    %109 = vector.multi_reduction <add>, %98, %cst_39 [1] : vector<3x24x1xf32> to vector<3x1xf32>
    %cst_40 = arith.constant 0.000000e+00 : f32
    %110 = vector.broadcast %cst_40 : f32 to vector<3x1xf32>
    %111 = arith.cmpf ogt, %109, %110 : vector<3x1xf32>
    %cst_41 = arith.constant 0.000000e+00 : f32
    %112 = vector.shape_cast %111 : vector<3x1xi1> to vector<3x1xi1>
    %113 = vector.broadcast %112 : vector<3x1xi1> to vector<3x64xi1>
    %114 = vector.broadcast %cst_41 : f32 to vector<3x64xf32>
    %115 = arith.select %113, %108, %114 : vector<3x64xi1>, vector<3x64xf32>
    %c0_42 = arith.constant 0 : index
    %c0_43 = arith.constant 0 : index
    %116 = vector.load %arg13[%c0_42, %c0_43] : memref<3x64xf32, #tpu.memory_space<vmem>>, vector<3x64xf32>
    tpu.vector_store %arg13[%c0_42, %c0_43], %115 {strides = array<i32>} : memref<3x64xf32, #tpu.memory_space<vmem>>, vector<3x64xf32>,
    return
  }
}

</mosaic_0001>

<llo_original>
// kernel: tpu_custom_call.1
$region0: #{tpu_custom_call.1}
  #allocation0 [shape = 'u32[]', space=smem, size = 0x4, offset = 0x4, fixed_abs, tag = 'smem constant byte address 0x4 - core index']
  #allocation1 [shape = 'u32[144,128]{1,0:T(1,128)}', space=vmem, size = 0x12000, scoped, tag = 'internal scratch']
  %s0 = inlined_call_operand.vmem [shape: f32[24,109], index: 0, kind: input, shape index: {}]
  %s1 = inlined_call_operand.hbm [shape: f32[5,24,24], index: 1, kind: input, shape index: {}]
  %s2 = inlined_call_operand.vmem [shape: f32[3,24,1], index: 2, kind: input, shape index: {}]
  %s3 = inlined_call_operand.hbm [shape: f32[109,768], index: 3, kind: input, shape index: {}]
  %s4 = inlined_call_operand.vmem [shape: f32[1,128], index: 4, kind: input, shape index: {}]
  %s5 = inlined_call_operand.hbm [shape: f32[128,384], index: 5, kind: input, shape index: {}]
  %s6 = inlined_call_operand.vmem [shape: f32[1,64], index: 6, kind: input, shape index: {}]
  %s7 = inlined_call_operand.hbm [shape: f32[64,384], index: 7, kind: input, shape index: {}]
  %s8 = inlined_call_operand.vmem [shape: f32[1,64], index: 8, kind: input, shape index: {}]
  %s9 = inlined_call_operand.vmem [shape: f32[64,64], index: 9, kind: input, shape index: {}]
  %s10 = inlined_call_operand.vmem [shape: f32[1,64], index: 10, kind: input, shape index: {}]
  %s11 = inlined_call_operand.hbm [shape: f32[64,64], index: 11, kind: input, shape index: {}]
  %s12 = inlined_call_operand.vmem [shape: f32[1,64], index: 12, kind: input, shape index: {}]
  %s13 = inlined_call_operand.hbm [shape: f32[3,64], index: 13, kind: output, shape index: {}]
  %s14 = sld [smem:[#allocation0]]
  $region82: #{tpu_custom_call.1} parent=0
    _
  %s16 = ssub.s32 1, %s14
  %s17 = scalar_select 0, %s16, %s14
  $region1: #{tpu_custom_call.1} parent=0
    #allocation2 [shape = 'u8[61440]{0}', space=vmem, size = 0xf000, scoped, tag = 'input window, operand 1, single buffered']
    #allocation3 [shape = 's32[1]{0}', space=sflag, size = 0x4, scoped, tag = 'scoped memory for tpu_custom_call.1']
    #allocation4 [shape = 's32[1]{0}', space=sflag, size = 0x4, scoped, tag = 'scoped memory for tpu_custom_call.1']
    #allocation5 [shape = 'u8[344064]{0}', space=vmem, size = 0x54000, scoped, tag = 'input window, operand 3, single buffered']
    #allocation6 [shape = 's32[1]{0}', space=sflag, size = 0x4, scoped, tag = 'scoped memory for tpu_custom_call.1']
    #allocation7 [shape = 'u8[196608]{0}', space=vmem, size = 0x30000, scoped, tag = 'input window, operand 5, single buffered']
    #allocation8 [shape = 'u8[98304]{0}', space=vmem, size = 0x18000, scoped, tag = 'input window, operand 7, single buffered']
    #allocation9 [shape = 's32[1]{0}', space=sflag, size = 0x4, scoped, tag = 'scoped memory for tpu_custom_call.1']
    #allocation10 [shape = 'u8[32768]{0}', space=vmem, size = 0x8000, scoped, tag = 'input window, operand 11, single buffered']
    #allocation11 [shape = 'u8[2048]{0}', space=vmem, size = 0x800, scoped, tag = 'output window, operand 0, single buffered']
    %18 = vsyncpa [#allocation3], 0
    %19 = vsyncpa [#allocation6], 0
    %20 = vsyncpa [#allocation9], 0
    %21 = vsyncpa [#allocation4], 0
    // Predicated region
    $region2: #{tpu_custom_call.1} parent=1 // pred_check
      _
    $region3: #{tpu_custom_call.1} parent=1 // pred_check_branch
      %23 = sbr.rel (0) target = $region5
    $region4: #{tpu_custom_call.1} parent=1 // pred_region
      _
    $region5: #{tpu_custom_call.1} parent=1 // pred_fallthru
      _
    // Predicated region
    $region6: #{tpu_custom_call.1} parent=1 // pred_check
      _
    $region7: #{tpu_custom_call.1} parent=1 // pred_check_branch
      %25 = sbr.rel (0) target = $region9
    $region8: #{tpu_custom_call.1} parent=1 // pred_region
      %s27 = ssub.s32 1920, 1920
      %28 = vsyncadd [#allocation3], %s27
      %s29 = sshll.u32 [#allocation2], 4
      %s30 = int_to_ptr.vmem [resolvable:$true] %s29
      %35 = dma.hbm_to_vmem [thread:$0]  %s1, 1920, %s30, [#allocation3], 128, 128, 8
    $region9: #{tpu_custom_call.1} parent=1 // pred_fallthru
      _
    // Predicated region
    $region10: #{tpu_custom_call.1} parent=1 // pred_check
      _
    $region11: #{tpu_custom_call.1} parent=1 // pred_check_branch
      %37 = sbr.rel (0) target = $region13
    $region12: #{tpu_custom_call.1} parent=1 // pred_region
      _
    $region13: #{tpu_custom_call.1} parent=1 // pred_fallthru
      _
    // Predicated region
    $region14: #{tpu_custom_call.1} parent=1 // pred_check
      _
    $region15: #{tpu_custom_call.1} parent=1 // pred_check_branch
      %39 = sbr.rel (0) target = $region17
    $region16: #{tpu_custom_call.1} parent=1 // pred_region
      %s41 = ssub.s32 10752, 10752
      %42 = vsyncadd [#allocation6], %s41
      %s43 = sshll.u32 [#allocation5], 4
      %s44 = int_to_ptr.vmem [resolvable:$true] %s43
      %49 = dma.hbm_to_vmem [thread:$0]  %s3, 10752, %s44, [#allocation6], 768, 768, 48
    $region17: #{tpu_custom_call.1} parent=1 // pred_fallthru
      _
    // Predicated region
    $region18: #{tpu_custom_call.1} parent=1 // pred_check
      _
    $region19: #{tpu_custom_call.1} parent=1 // pred_check_branch
      %51 = sbr.rel (0) target = $region21
    $region20: #{tpu_custom_call.1} parent=1 // pred_region
      _
    $region21: #{tpu_custom_call.1} parent=1 // pred_fallthru
      _
    // Predicated region
    $region22: #{tpu_custom_call.1} parent=1 // pred_check
      _
    $region23: #{tpu_custom_call.1} parent=1 // pred_check_branch
      %53 = sbr.rel (0) target = $region25
    $region24: #{tpu_custom_call.1} parent=1 // pred_region
      %s55 = ssub.s32 6144, 6144
      %56 = vsyncadd [#allocation6], %s55
      %s57 = sshll.u32 [#allocation7], 4
      %s58 = int_to_ptr.vmem [resolvable:$true] %s57
      %63 = dma.hbm_to_vmem [thread:$0]  %s5, 6144, %s58, [#allocation6], 384, 384, 24
    $region25: #{tpu_custom_call.1} parent=1 // pred_fallthru
      _
    // Predicated region
    $region26: #{tpu_custom_call.1} parent=1 // pred_check
      _
    $region27: #{tpu_custom_call.1} parent=1 // pred_check_branch
      %65 = sbr.rel (0) target = $region29
    $region28: #{tpu_custom_call.1} parent=1 // pred_region
      _
    $region29: #{tpu_custom_call.1} parent=1 // pred_fallthru
      _
    // Predicated region
    $region30: #{tpu_custom_call.1} parent=1 // pred_check
      _
    $region31: #{tpu_custom_call.1} parent=1 // pred_check_branch
      %67 = sbr.rel (0) target = $region33
    $region32: #{tpu_custom_call.1} parent=1 // pred_region
      %s69 = ssub.s32 3072, 3072
      %70 = vsyncadd [#allocation9], %s69
      %s71 = sshll.u32 [#allocation8], 4
      %s72 = int_to_ptr.vmem [resolvable:$true] %s71
      %77 = dma.hbm_to_vmem [thread:$0]  %s7, 3072, %s72, [#allocation9], 384, 384, 24
    $region33: #{tpu_custom_call.1} parent=1 // pred_fallthru
      _
    // Predicated region
    $region34: #{tpu_custom_call.1} parent=1 // pred_check
      _
    $region35: #{tpu_custom_call.1} parent=1 // pred_check_branch
      %79 = sbr.rel (0) target = $region37
    $region36: #{tpu_custom_call.1} parent=1 // pred_region
      _
    $region37: #{tpu_custom_call.1} parent=1 // pred_fallthru
      _
    // Predicated region
    $region38: #{tpu_custom_call.1} parent=1 // pred_check
      _
    $region39: #{tpu_custom_call.1} parent=1 // pred_check_branch
      %81 = sbr.rel (0) target = $region41
    $region40: #{tpu_custom_call.1} parent=1 // pred_region
      _
    $region41: #{tpu_custom_call.1} parent=1 // pred_fallthru
      _
    // Predicated region
    $region42: #{tpu_custom_call.1} parent=1 // pred_check
      _
    $region43: #{tpu_custom_call.1} parent=1 // pred_check_branch
      %83 = sbr.rel (0) target = $region45
    $region44: #{tpu_custom_call.1} parent=1 // pred_region
      _
    $region45: #{tpu_custom_call.1} parent=1 // pred_fallthru
      _
    // Predicated region
    $region46: #{tpu_custom_call.1} parent=1 // pred_check
      _
    $region47: #{tpu_custom_call.1} parent=1 // pred_check_branch
      %85 = sbr.rel (0) target = $region49
    $region48: #{tpu_custom_call.1} parent=1 // pred_region
      %s87 = ssub.s32 1024, 1024
      %88 = vsyncadd [#allocation9], %s87
      %s89 = sshll.u32 [#allocation10], 4
      %s90 = int_to_ptr.vmem [resolvable:$true] %s89
      %95 = dma.hbm_to_vmem [thread:$0]  %s11, 1024, %s90, [#allocation9], 128, 128, 8
    $region49: #{tpu_custom_call.1} parent=1 // pred_fallthru
      _
    // Predicated region
    $region50: #{tpu_custom_call.1} parent=1 // pred_check
      _
    $region51: #{tpu_custom_call.1} parent=1 // pred_check_branch
      %97 = sbr.rel (0) target = $region53
    $region52: #{tpu_custom_call.1} parent=1 // pred_region
      _
    $region53: #{tpu_custom_call.1} parent=1 // pred_fallthru
      _
    // Predicated region
    $region54: #{tpu_custom_call.1} parent=1 // pred_check
      _
    $region55: #{tpu_custom_call.1} parent=1 // pred_check_branch
      %99 = sbr.rel (0) target = $region57
    $region56: #{tpu_custom_call.1} parent=1 // pred_region
      %100 = dma.done [#allocation3], 1920
    $region57: #{tpu_custom_call.1} parent=1 // pred_fallthru
      _
    // Predicated region
    $region58: #{tpu_custom_call.1} parent=1 // pred_check
      _
    $region59: #{tpu_custom_call.1} parent=1 // pred_check_branch
      %102 = sbr.rel (0) target = $region61
    $region60: #{tpu_custom_call.1} parent=1 // pred_region
      %103 = dma.done [#allocation6], 10752
    $region61: #{tpu_custom_call.1} parent=1 // pred_fallthru
      _
    // Predicated region
    $region62: #{tpu_custom_call.1} parent=1 // pred_check
      _
    $region63: #{tpu_custom_call.1} parent=1 // pred_check_branch
      %105 = sbr.rel (0) target = $region65
    $region64: #{tpu_custom_call.1} parent=1 // pred_region
      %106 = dma.done [#allocation6], 6144
    $region65: #{tpu_custom_call.1} parent=1 // pred_fallthru
      _
    // Predicated region
    $region66: #{tpu_custom_call.1} parent=1 // pred_check
      _
    $region67: #{tpu_custom_call.1} parent=1 // pred_check_branch
      %108 = sbr.rel (0) target = $region69
    $region68: #{tpu_custom_call.1} parent=1 // pred_region
      %109 = dma.done [#allocation9], 3072
    $region69: #{tpu_custom_call.1} parent=1 // pred_fallthru
      _
    // Predicated region
    $region70: #{tpu_custom_call.1} parent=1 // pred_check
      _
    $region71: #{tpu_custom_call.1} parent=1 // pred_check_branch
      %111 = sbr.rel (0) target = $region73
    $region72: #{tpu_custom_call.1} parent=1 // pred_region
      %112 = dma.done [#allocation9], 1024
    $region73: #{tpu_custom_call.1} parent=1 // pred_fallthru
      _
    %v113 = vld [vmem:[#allocation2] sm:$0xff]
    %v114 = vld [vmem:[#allocation2 + $0x8] sm:$0xff]
    %v115 = vld [vmem:[#allocation2 + $0x10] sm:$0xff]
    %v116 = vld [vmem:[#allocation2 + $0x18] sm:$0xff]
    %v117 = vld [vmem:[#allocation2 + $0x20] sm:$0xff]
    %v118 = vld [vmem:[#allocation2 + $0x28] sm:$0xff]
    %v119 = vld [vmem:[#allocation2 + $0x30] sm:$0xff]
    %v120 = vld [vmem:[#allocation2 + $0x38] sm:$0xff]
    %v121 = vld [vmem:[#allocation2 + $0x40] sm:$0xff]
    %v122 = vld [vmem:[#allocation2 + $0x48] sm:$0xff]
    %v123 = vld [vmem:[#allocation2 + $0x50] sm:$0xff]
    %v124 = vld [vmem:[#allocation2 + $0x58] sm:$0xff]
    %v125 = vld [vmem:[#allocation2 + $0x60] sm:$0xff]
    %v126 = vld [vmem:[#allocation2 + $0x68] sm:$0xff]
    %v127 = vld [vmem:[#allocation2 + $0x70] sm:$0xff]
    %v128 = vld [vmem:[%s0] sm:$0xff]
    %v129 = vld [vmem:[%s0 + $0x8] sm:$0xff]
    %v130 = vld [vmem:[%s0 + $0x10] sm:$0xff]
    %v131 = vld [vmem:[#allocation5] sm:$0xff]
    %v132 = vld [vmem:[#allocation5 + $0x8] sm:$0xff]
    %v133 = vld [vmem:[#allocation5 + $0x10] sm:$0xff]
    %v134 = vld [vmem:[#allocation5 + $0x18] sm:$0xff]
    %v135 = vld [vmem:[#allocation5 + $0x20] sm:$0xff]
    %v136 = vld [vmem:[#allocation5 + $0x28] sm:$0xff]
    %v137 = vld [vmem:[#allocation5 + $0x30] sm:$0xff]
    %v138 = vld [vmem:[#allocation5 + $0x38] sm:$0xff]
    %v139 = vld [vmem:[#allocation5 + $0x40] sm:$0xff]
    %v140 = vld [vmem:[#allocation5 + $0x48] sm:$0xff]
    %v141 = vld [vmem:[#allocation5 + $0x50] sm:$0xff]
    %v142 = vld [vmem:[#allocation5 + $0x58] sm:$0xff]
    %v143 = vld [vmem:[#allocation5 + $0x60] sm:$0xff]
    %v144 = vld [vmem:[#allocation5 + $0x68] sm:$0xff]
    %v145 = vld [vmem:[#allocation5 + $0x70] sm:$0xff]
    %v146 = vld [vmem:[#allocation5 + $0x78] sm:$0xff]
    %v147 = vld [vmem:[#allocation5 + $0x80] sm:$0xff]
    %v148 = vld [vmem:[#allocation5 + $0x88] sm:$0xff]
    %v149 = vld [vmem:[#allocation5 + $0x90] sm:$0xff]
    %v150 = vld [vmem:[#allocation5 + $0x98] sm:$0xff]
    %v151 = vld [vmem:[#allocation5 + $0xa0] sm:$0xff]
    %v152 = vld [vmem:[#allocation5 + $0xa8] sm:$0xff]
    %v153 = vld [vmem:[#allocation5 + $0xb0] sm:$0xff]
    %v154 = vld [vmem:[#allocation5 + $0xb8] sm:$0xff]
    %v155 = vld [vmem:[#allocation5 + $0xc0] sm:$0xff]
    %v156 = vld [vmem:[#allocation5 + $0xc8] sm:$0xff]
    %v157 = vld [vmem:[#allocation5 + $0xd0] sm:$0xff]
    %v158 = vld [vmem:[#allocation5 + $0xd8] sm:$0xff]
    %v159 = vld [vmem:[#allocation5 + $0xe0] sm:$0xff]
    %v160 = vld [vmem:[#allocation5 + $0xe8] sm:$0xff]
    %v161 = vld [vmem:[#allocation5 + $0xf0] sm:$0xff]
    %v162 = vld [vmem:[#allocation5 + $0xf8] sm:$0xff]
    %v163 = vld [vmem:[#allocation5 + $0x100] sm:$0xff]
    %v164 = vld [vmem:[#allocation5 + $0x108] sm:$0xff]
    %v165 = vld [vmem:[#allocation5 + $0x110] sm:$0xff]
    %v166 = vld [vmem:[#allocation5 + $0x118] sm:$0xff]
    %v167 = vld [vmem:[#allocation5 + $0x120] sm:$0xff]
    %v168 = vld [vmem:[#allocation5 + $0x128] sm:$0xff]
    %v169 = vld [vmem:[#allocation5 + $0x130] sm:$0xff]
    %v170 = vld [vmem:[#allocation5 + $0x138] sm:$0xff]
    %v171 = vld [vmem:[#allocation5 + $0x140] sm:$0xff]
    %v172 = vld [vmem:[#allocation5 + $0x148] sm:$0xff]
    %v173 = vld [vmem:[#allocation5 + $0x150] sm:$0xff]
    %v174 = vld [vmem:[#allocation5 + $0x158] sm:$0xff]
    %v175 = vld [vmem:[#allocation5 + $0x160] sm:$0xff]
    %v176 = vld [vmem:[#allocation5 + $0x168] sm:$0xff]
    %v177 = vld [vmem:[#allocation5 + $0x170] sm:$0xff]
    %v178 = vld [vmem:[#allocation5 + $0x178] sm:$0xff]
    %v179 = vld [vmem:[#allocation5 + $0x180] sm:$0xff]
    %v180 = vld [vmem:[#allocation5 + $0x188] sm:$0xff]
    %v181 = vld [vmem:[#allocation5 + $0x190] sm:$0xff]
    %v182 = vld [vmem:[#allocation5 + $0x198] sm:$0xff]
    %v183 = vld [vmem:[#allocation5 + $0x1a0] sm:$0xff]
    %v184 = vld [vmem:[#allocation5 + $0x1a8] sm:$0xff]
    %v185 = vld [vmem:[#allocation5 + $0x1b0] sm:$0xff]
    %v186 = vld [vmem:[#allocation5 + $0x1b8] sm:$0xff]
    %v187 = vld [vmem:[#allocation5 + $0x1c0] sm:$0xff]
    %v188 = vld [vmem:[#allocation5 + $0x1c8] sm:$0xff]
    %v189 = vld [vmem:[#allocation5 + $0x1d0] sm:$0xff]
    %v190 = vld [vmem:[#allocation5 + $0x1d8] sm:$0xff]
    %v191 = vld [vmem:[#allocation5 + $0x1e0] sm:$0xff]
    %v192 = vld [vmem:[#allocation5 + $0x1e8] sm:$0xff]
    %v193 = vld [vmem:[#allocation5 + $0x1f0] sm:$0xff]
    %v194 = vld [vmem:[#allocation5 + $0x1f8] sm:$0xff]
    %v195 = vld [vmem:[#allocation5 + $0x200] sm:$0xff]
    %v196 = vld [vmem:[#allocation5 + $0x208] sm:$0xff]
    %v197 = vld [vmem:[#allocation5 + $0x210] sm:$0xff]
    %v198 = vld [vmem:[#allocation5 + $0x218] sm:$0xff]
    %v199 = vld [vmem:[#allocation5 + $0x220] sm:$0xff]
    %v200 = vld [vmem:[#allocation5 + $0x228] sm:$0xff]
    %v201 = vld [vmem:[#allocation5 + $0x230] sm:$0xff]
    %v202 = vld [vmem:[#allocation5 + $0x238] sm:$0xff]
    %v203 = vld [vmem:[#allocation5 + $0x240] sm:$0xff]
    %v204 = vld [vmem:[#allocation5 + $0x248] sm:$0xff]
    %v205 = vld [vmem:[#allocation5 + $0x250] sm:$0xff]
    %v206 = vld [vmem:[#allocation5 + $0x258] sm:$0xff]
    %v207 = vld [vmem:[#allocation5 + $0x260] sm:$0xff]
    %v208 = vld [vmem:[#allocation5 + $0x268] sm:$0xff]
    %v209 = vld [vmem:[#allocation5 + $0x270] sm:$0x1f]
    %v210 = vld [vmem:[#allocation5 + $0x278] sm:$0x1f]
    %v211 = vld [vmem:[#allocation5 + $0x280] sm:$0x1f]
    %v212 = vld [vmem:[#allocation5 + $0x288] sm:$0x1f]
    %v213 = vld [vmem:[#allocation5 + $0x290] sm:$0x1f]
    %v214 = vld [vmem:[#allocation5 + $0x298] sm:$0x1f]
    %vm215 = vcmask 891904
    %v217 = vsel %vm215, %v128, 0
    %v220 = vsel %vm215, %v129, 0
    %v223 = vsel %vm215, %v130, 0
    %vm225 = vcmask 1044480
    %v227 = vsel %vm225, %v209, 0
    %v230 = vsel %vm225, %v210, 0
    %v233 = vsel %vm225, %v211, 0
    %v236 = vsel %vm225, %v212, 0
    %v239 = vsel %vm225, %v213, 0
    %v242 = vsel %vm225, %v214, 0
    %244 = vmatprep.subr.mxu0 %v132
    %245 = vmatpush1.msra.mxu0 %v131
    %246 = vmatprep.subr.mxu0 %v138
    %247 = vmatpush1.msra.mxu0 %v137
    %248 = vmatprep.subr.mxu0 %v144
    %249 = vmatpush1.msra.mxu0 %v143
    %250 = vmatprep.subr.mxu0 %v150
    %251 = vmatpush1.msra.mxu0 %v149
    %252 = vmatprep.subr.mxu0 %v156
    %253 = vmatpush1.msra.mxu0 %v155
    %254 = vmatprep.subr.mxu0 %v162
    %255 = vmatpush1.msra.mxu0 %v161
    %256 = vmatprep.subr.mxu0 %v168
    %257 = vmatpush1.msra.mxu0 %v167
    %258 = vmatprep.subr.mxu0 %v174
    %259 = vmatpush1.msra.mxu0 %v173
    %260 = vmatprep.subr.mxu0 %v180
    %261 = vmatpush1.msra.mxu0 %v179
    %262 = vmatprep.subr.mxu0 %v186
    %263 = vmatpush1.msra.mxu0 %v185
    %264 = vmatprep.subr.mxu0 %v192
    %265 = vmatpush1.msra.mxu0 %v191
    %266 = vmatprep.subr.mxu0 %v198
    %267 = vmatpush1.msra.mxu0 %v197
    %268 = vmatprep.subr.mxu0 %v204
    %269 = vmatpush1.msra.mxu0 %v203
    %270 = vmatprep.subr.mxu0 %v230
    %271 = vmatpush1.msra.mxu0 %v227
    %272 = vmatprep.subr.mxu0 0.0
    %273 = vmatpush1.msra.mxu0 0.0
    %274 = vmatprep.subr.mxu0 0.0
    %275 = vmatpush1.msra.mxu0 0.0
    %276 = vmatprep.subr.mxu0 0.0
    %277 = vmatpush1.msra.mxu0 0.0
    %278 = vmatprep.subr.mxu0 0.0
    %279 = vmatpush1.msra.mxu0 0.0
    %280 = vmatprep.subr.mxu0 0.0
    %281 = vmatpush1.msra.mxu0 0.0
    %282 = vmatprep.subr.mxu0 0.0
    %283 = vmatpush1.msra.mxu0 0.0
    %284 = vmatprep.subr.mxu0 0.0
    %285 = vmatpush1.msra.mxu0 0.0
    %286 = vmatprep.subr.mxu0 0.0
    %287 = vmatpush1.msra.mxu0 0.0
    %288 = vmatprep.subr.mxu0 0.0
    %289 = vmatpush1.msra.mxu0 0.0
    %290 = vmatprep.subr.mxu0 0.0
    %291 = vmatpush1.msra.mxu0 0.0
    %292 = vmatprep.subr.mxu0 0.0
    %293 = vmatpush1.msra.mxu0 0.0
    %294 = vmatprep.subr.mxu0 0.0
    %295 = vmatpush1.msra.mxu0 0.0
    %296 = vmatprep.subr.mxu0 0.0
    %297 = vmatpush1.msra.mxu0 0.0
    %298 = vmatprep.subr.mxu0 0.0
    %299 = vmatpush1.msra.mxu0 0.0
    %300 = vmatprep.subr.mxu0 0.0
    %301 = vmatpush1.msra.mxu0 0.0
    %302 = vmatprep.subr.mxu0 0.0
    %303 = vmatpush1.msra.mxu0 0.0
    %304 = vmatprep.subr.mxu0 0.0
    %305 = vmatpush1.msra.mxu0 0.0
    %306 = vmatprep.subr.mxu0 0.0
    %307 = vmatpush1.msra.mxu0 0.0
    %308 = vmatprep.mubr.f32.mxu0 0.0
    %309 = vmatmul.mubr.f32.gmra.mrb[0].mxu0 %v217
    %v310 = vpop.f32.mrb[0].mxu0
    %v311 = vadd.f32 0.0, %v310
    %v312 = vpop.f32.mrb[0].mxu0
    %v313 = vadd.f32 0.0, %v312
    %314 = vmatprep.mubr.f32.mxu0 0.0
    %315 = vmatmul.mubr.f32.gmra.mrb[0].mxu0 %v220
    %v316 = vpop.f32.mrb[0].mxu0
    %v317 = vadd.f32 0.0, %v316
    %v318 = vpop.f32.mrb[0].mxu0
    %v319 = vadd.f32 0.0, %v318
    %320 = vmatprep.mubr.f32.mxu0 0.0
    %321 = vmatmul.mubr.f32.gmra.mrb[0].mxu0 %v223
    %v322 = vpop.f32.mrb[0].mxu0
    %v323 = vadd.f32 0.0, %v322
    %v324 = vpop.f32.mrb[0].mxu0
    %v325 = vadd.f32 0.0, %v324
    %326 = vdwg.mxu0
    %327 = vmatprep.subr.mxu0 %v134
    %328 = vmatpush1.msra.mxu0 %v133
    %329 = vmatprep.subr.mxu0 %v140
    %330 = vmatpush1.msra.mxu0 %v139
    %331 = vmatprep.subr.mxu0 %v146
    %332 = vmatpush1.msra.mxu0 %v145
    %333 = vmatprep.subr.mxu0 %v152
    %334 = vmatpush1.msra.mxu0 %v151
    %335 = vmatprep.subr.mxu0 %v158
    %336 = vmatpush1.msra.mxu0 %v157
    %337 = vmatprep.subr.mxu0 %v164
    %338 = vmatpush1.msra.mxu0 %v163
    %339 = vmatprep.subr.mxu0 %v170
    %340 = vmatpush1.msra.mxu0 %v169
    %341 = vmatprep.subr.mxu0 %v176
    %342 = vmatpush1.msra.mxu0 %v175
    %343 = vmatprep.subr.mxu0 %v182
    %344 = vmatpush1.msra.mxu0 %v181
    %345 = vmatprep.subr.mxu0 %v188
    %346 = vmatpush1.msra.mxu0 %v187
    %347 = vmatprep.subr.mxu0 %v194
    %348 = vmatpush1.msra.mxu0 %v193
    %349 = vmatprep.subr.mxu0 %v200
    %350 = vmatpush1.msra.mxu0 %v199
    %351 = vmatprep.subr.mxu0 %v206
    %352 = vmatpush1.msra.mxu0 %v205
    %353 = vmatprep.subr.mxu0 %v236
    %354 = vmatpush1.msra.mxu0 %v233
    %355 = vmatprep.subr.mxu0 0.0
    %356 = vmatpush1.msra.mxu0 0.0
    %357 = vmatprep.subr.mxu0 0.0
    %358 = vmatpush1.msra.mxu0 0.0
    %359 = vmatprep.subr.mxu0 0.0
    %360 = vmatpush1.msra.mxu0 0.0
    %361 = vmatprep.subr.mxu0 0.0
    %362 = vmatpush1.msra.mxu0 0.0
    %363 = vmatprep.subr.mxu0 0.0
    %364 = vmatpush1.msra.mxu0 0.0
    %365 = vmatprep.subr.mxu0 0.0
    %366 = vmatpush1.msra.mxu0 0.0
    %367 = vmatprep.subr.mxu0 0.0
    %368 = vmatpush1.msra.mxu0 0.0
    %369 = vmatprep.subr.mxu0 0.0
    %370 = vmatpush1.msra.mxu0 0.0
    %371 = vmatprep.subr.mxu0 0.0
    %372 = vmatpush1.msra.mxu0 0.0
    %373 = vmatprep.subr.mxu0 0.0
    %374 = vmatpush1.msra.mxu0 0.0
    %375 = vmatprep.subr.mxu0 0.0
    %376 = vmatpush1.msra.mxu0 0.0
    %377 = vmatprep.subr.mxu0 0.0
    %378 = vmatpush1.msra.mxu0 0.0
    %379 = vmatprep.subr.mxu0 0.0
    %380 = vmatpush1.msra.mxu0 0.0
    %381 = vmatprep.subr.mxu0 0.0
    %382 = vmatpush1.msra.mxu0 0.0
    %383 = vmatprep.subr.mxu0 0.0
    %384 = vmatpush1.msra.mxu0 0.0
    %385 = vmatprep.subr.mxu0 0.0
    %386 = vmatpush1.msra.mxu0 0.0
    %387 = vmatprep.subr.mxu0 0.0
    %388 = vmatpush1.msra.mxu0 0.0
    %389 = vmatprep.subr.mxu0 0.0
    %390 = vmatpush1.msra.mxu0 0.0
    %391 = vmatprep.mubr.f32.mxu0 0.0
    %392 = vmatmul.mubr.f32.gmra.mrb[0].mxu0 %v217
    %v393 = vpop.f32.mrb[0].mxu0
    %v394 = vadd.f32 0.0, %v393
    %v395 = vpop.f32.mrb[0].mxu0
    %v396 = vadd.f32 0.0, %v395
    %397 = vmatprep.mubr.f32.mxu0 0.0
    %398 = vmatmul.mubr.f32.gmra.mrb[0].mxu0 %v220
    %v399 = vpop.f32.mrb[0].mxu0
    %v400 = vadd.f32 0.0, %v399
    %v401 = vpop.f32.mrb[0].mxu0
    %v402 = vadd.f32 0.0, %v401
    %403 = vmatprep.mubr.f32.mxu0 0.0
    %404 = vmatmul.mubr.f32.gmra.mrb[0].mxu0 %v223
    %v405 = vpop.f32.mrb[0].mxu0
    %v406 = vadd.f32 0.0, %v405
    %v407 = vpop.f32.mrb[0].mxu0
    %v408 = vadd.f32 0.0, %v407
    %409 = vdwg.mxu0
    %410 = vmatprep.subr.mxu0 %v136
    %411 = vmatpush1.msra.mxu0 %v135
    %412 = vmatprep.subr.mxu0 %v142
    %413 = vmatpush1.msra.mxu0 %v141
    %414 = vmatprep.subr.mxu0 %v148
    %415 = vmatpush1.msra.mxu0 %v147
    %416 = vmatprep.subr.mxu0 %v154
    %417 = vmatpush1.msra.mxu0 %v153
    %418 = vmatprep.subr.mxu0 %v160
    %419 = vmatpush1.msra.mxu0 %v159
    %420 = vmatprep.subr.mxu0 %v166
    %421 = vmatpush1.msra.mxu0 %v165
    %422 = vmatprep.subr.mxu0 %v172
    %423 = vmatpush1.msra.mxu0 %v171
    %424 = vmatprep.subr.mxu0 %v178
    %425 = vmatpush1.msra.mxu0 %v177
    %426 = vmatprep.subr.mxu0 %v184
    %427 = vmatpush1.msra.mxu0 %v183
    %428 = vmatprep.subr.mxu0 %v190
    %429 = vmatpush1.msra.mxu0 %v189
    %430 = vmatprep.subr.mxu0 %v196
    %431 = vmatpush1.msra.mxu0 %v195
    %432 = vmatprep.subr.mxu0 %v202
    %433 = vmatpush1.msra.mxu0 %v201
    %434 = vmatprep.subr.mxu0 %v208
    %435 = vmatpush1.msra.mxu0 %v207
    %436 = vmatprep.subr.mxu0 %v242
    %437 = vmatpush1.msra.mxu0 %v239
    %438 = vmatprep.subr.mxu0 0.0
    %439 = vmatpush1.msra.mxu0 0.0
    %440 = vmatprep.subr.mxu0 0.0
    %441 = vmatpush1.msra.mxu0 0.0
    %442 = vmatprep.subr.mxu0 0.0
    %443 = vmatpush1.msra.mxu0 0.0
    %444 = vmatprep.subr.mxu0 0.0
    %445 = vmatpush1.msra.mxu0 0.0
    %446 = vmatprep.subr.mxu0 0.0
    %447 = vmatpush1.msra.mxu0 0.0
    %448 = vmatprep.subr.mxu0 0.0
    %449 = vmatpush1.msra.mxu0 0.0
    %450 = vmatprep.subr.mxu0 0.0
    %451 = vmatpush1.msra.mxu0 0.0
    %452 = vmatprep.subr.mxu0 0.0
    %453 = vmatpush1.msra.mxu0 0.0
    %454 = vmatprep.subr.mxu0 0.0
    %455 = vmatpush1.msra.mxu0 0.0
    %456 = vmatprep.subr.mxu0 0.0
    %457 = vmatpush1.msra.mxu0 0.0
    %458 = vmatprep.subr.mxu0 0.0
    %459 = vmatpush1.msra.mxu0 0.0
    %460 = vmatprep.subr.mxu0 0.0
    %461 = vmatpush1.msra.mxu0 0.0
    %462 = vmatprep.subr.mxu0 0.0
    %463 = vmatpush1.msra.mxu0 0.0
    %464 = vmatprep.subr.mxu0 0.0
    %465 = vmatpush1.msra.mxu0 0.0
    %466 = vmatprep.subr.mxu0 0.0
    %467 = vmatpush1.msra.mxu0 0.0
    %468 = vmatprep.subr.mxu0 0.0
    %469 = vmatpush1.msra.mxu0 0.0
    %470 = vmatprep.subr.mxu0 0.0
    %471 = vmatpush1.msra.mxu0 0.0
    %472 = vmatprep.subr.mxu0 0.0
    %473 = vmatpush1.msra.mxu0 0.0
    %474 = vmatprep.mubr.f32.mxu0 0.0
    %475 = vmatmul.mubr.f32.gmra.mrb[0].mxu0 %v217
    %v476 = vpop.f32.mrb[0].mxu0
    %v477 = vadd.f32 0.0, %v476
    %v478 = vpop.f32.mrb[0].mxu0
    %v479 = vadd.f32 0.0, %v478
    %480 = vmatprep.mubr.f32.mxu0 0.0
    %481 = vmatmul.mubr.f32.gmra.mrb[0].mxu0 %v220
    %v482 = vpop.f32.mrb[0].mxu0
    %v483 = vadd.f32 0.0, %v482
    %v484 = vpop.f32.mrb[0].mxu0
    %v485 = vadd.f32 0.0, %v484
    %486 = vmatprep.mubr.f32.mxu0 0.0
    %487 = vmatmul.mubr.f32.gmra.mrb[0].mxu0 %v223
    %v488 = vpop.f32.mrb[0].mxu0
    %v489 = vadd.f32 0.0, %v488
    %v490 = vpop.f32.mrb[0].mxu0
    %v491 = vadd.f32 0.0, %v490
    %492 = vdwg.mxu0
    %v493 = vld [vmem:[%s4] sm:$0x1]
    %v495 = vlaneseq
    %v496 = vshrl.u32 %v495, 7
    %v497 = vsub.s32 0, %v496
    %v498 = vrot.slane %v493, %v497
    %v500 = vadd.f32 %v311, %v498
    %v501 = vadd.f32 %v317, %v498
    %v502 = vadd.f32 %v323, %v498
    %vm503 = vcmask 195584
    %v505 = vsel %vm503, %v113, 0
    %v508 = vsel %vm503, %v114, 0
    %v511 = vsel %vm503, %v115, 0
    %513 = vmatprep.subr.mxu0 0.0
    %514 = vmatpush1.msra.mxu0 %v313
    %515 = vmatprep.subr.mxu0 0.0
    %516 = vmatpush1.msra.mxu0 %v319
    %517 = vmatprep.subr.mxu0 0.0
    %518 = vmatpush1.msra.mxu0 %v325
    %519 = vmatprep.subr.mxu0 0.0
    %520 = vmatpush1.msra.mxu0 0.0
    %521 = vmatprep.subr.mxu0 0.0
    %522 = vmatpush1.msra.mxu0 0.0
    %523 = vmatprep.subr.mxu0 0.0
    %524 = vmatpush1.msra.mxu0 0.0
    %525 = vmatprep.subr.mxu0 0.0
    %526 = vmatpush1.msra.mxu0 0.0
    %527 = vmatprep.subr.mxu0 0.0
    %528 = vmatpush1.msra.mxu0 0.0
    %529 = vmatprep.subr.mxu0 0.0
    %530 = vmatpush1.msra.mxu0 0.0
    %531 = vmatprep.subr.mxu0 0.0
    %532 = vmatpush1.msra.mxu0 0.0
    %533 = vmatprep.subr.mxu0 0.0
    %534 = vmatpush1.msra.mxu0 0.0
    %535 = vmatprep.subr.mxu0 0.0
    %536 = vmatpush1.msra.mxu0 0.0
    %537 = vmatprep.subr.mxu0 0.0
    %538 = vmatpush1.msra.mxu0 0.0
    %539 = vmatprep.subr.mxu0 0.0
    %540 = vmatpush1.msra.mxu0 0.0
    %541 = vmatprep.subr.mxu0 0.0
    %542 = vmatpush1.msra.mxu0 0.0
    %543 = vmatprep.subr.mxu0 0.0
    %544 = vmatpush1.msra.mxu0 0.0
    %545 = vmatprep.subr.mxu0 0.0
    %546 = vmatpush1.msra.mxu0 0.0
    %547 = vmatprep.subr.mxu0 0.0
    %548 = vmatpush1.msra.mxu0 0.0
    %549 = vmatprep.subr.mxu0 0.0
    %550 = vmatpush1.msra.mxu0 0.0
    %551 = vmatprep.subr.mxu0 0.0
    %552 = vmatpush1.msra.mxu0 0.0
    %553 = vmatprep.subr.mxu0 0.0
    %554 = vmatpush1.msra.mxu0 0.0
    %555 = vmatprep.subr.mxu0 0.0
    %556 = vmatpush1.msra.mxu0 0.0
    %557 = vmatprep.subr.mxu0 0.0
    %558 = vmatpush1.msra.mxu0 0.0
    %559 = vmatprep.subr.mxu0 0.0
    %560 = vmatpush1.msra.mxu0 0.0
    %561 = vmatprep.subr.mxu0 0.0
    %562 = vmatpush1.msra.mxu0 0.0
    %563 = vmatprep.subr.mxu0 0.0
    %564 = vmatpush1.msra.mxu0 0.0
    %565 = vmatprep.subr.mxu0 0.0
    %566 = vmatpush1.msra.mxu0 0.0
    %567 = vmatprep.subr.mxu0 0.0
    %568 = vmatpush1.msra.mxu0 0.0
    %569 = vmatprep.subr.mxu0 0.0
    %570 = vmatpush1.msra.mxu0 0.0
    %571 = vmatprep.subr.mxu0 0.0
    %572 = vmatpush1.msra.mxu0 0.0
    %573 = vmatprep.subr.mxu0 0.0
    %574 = vmatpush1.msra.mxu0 0.0
    %575 = vmatprep.subr.mxu0 0.0
    %576 = vmatpush1.msra.mxu0 0.0
    %577 = vmatprep.mubr.f32.mxu0 0.0
    %578 = vmatmul.mubr.f32.gmra.mrb[0].mxu0 %v505
    %v579 = vpop.f32.mrb[0].mxu0
    %v580 = vadd.f32 0.0, %v579
    %v581 = vpop.f32.mrb[0].mxu0
    %582 = vmatprep.mubr.f32.mxu0 0.0
    %583 = vmatmul.mubr.f32.gmra.mrb[0].mxu0 %v508
    %v584 = vpop.f32.mrb[0].mxu0
    %v585 = vadd.f32 0.0, %v584
    %v586 = vpop.f32.mrb[0].mxu0
    %587 = vmatprep.mubr.f32.mxu0 0.0
    %588 = vmatmul.mubr.f32.gmra.mrb[0].mxu0 %v511
    %v589 = vpop.f32.mrb[0].mxu0
    %v590 = vadd.f32 0.0, %v589
    %v591 = vpop.f32.mrb[0].mxu0
    %592 = vdwg.mxu0
    %v593 = vadd.f32 %v500, %v580
    %v594 = vadd.f32 %v501, %v585
    %v595 = vadd.f32 %v502, %v590
    %v597 = vsel %vm503, %v116, 0
    %v600 = vsel %vm503, %v117, 0
    %v603 = vsel %vm503, %v118, 0
    %605 = vmatprep.subr.mxu0 0.0
    %606 = vmatpush1.msra.mxu0 %v394
    %607 = vmatprep.subr.mxu0 0.0
    %608 = vmatpush1.msra.mxu0 %v400
    %609 = vmatprep.subr.mxu0 0.0
    %610 = vmatpush1.msra.mxu0 %v406
    %611 = vmatprep.subr.mxu0 0.0
    %612 = vmatpush1.msra.mxu0 0.0
    %613 = vmatprep.subr.mxu0 0.0
    %614 = vmatpush1.msra.mxu0 0.0
    %615 = vmatprep.subr.mxu0 0.0
    %616 = vmatpush1.msra.mxu0 0.0
    %617 = vmatprep.subr.mxu0 0.0
    %618 = vmatpush1.msra.mxu0 0.0
    %619 = vmatprep.subr.mxu0 0.0
    %620 = vmatpush1.msra.mxu0 0.0
    %621 = vmatprep.subr.mxu0 0.0
    %622 = vmatpush1.msra.mxu0 0.0
    %623 = vmatprep.subr.mxu0 0.0
    %624 = vmatpush1.msra.mxu0 0.0
    %625 = vmatprep.subr.mxu0 0.0
    %626 = vmatpush1.msra.mxu0 0.0
    %627 = vmatprep.subr.mxu0 0.0
    %628 = vmatpush1.msra.mxu0 0.0
    %629 = vmatprep.subr.mxu0 0.0
    %630 = vmatpush1.msra.mxu0 0.0
    %631 = vmatprep.subr.mxu0 0.0
    %632 = vmatpush1.msra.mxu0 0.0
    %633 = vmatprep.subr.mxu0 0.0
    %634 = vmatpush1.msra.mxu0 0.0
    %635 = vmatprep.subr.mxu0 0.0
    %636 = vmatpush1.msra.mxu0 0.0
    %637 = vmatprep.subr.mxu0 0.0
    %638 = vmatpush1.msra.mxu0 0.0
    %639 = vmatprep.subr.mxu0 0.0
    %640 = vmatpush1.msra.mxu0 0.0
    %641 = vmatprep.subr.mxu0 0.0
    %642 = vmatpush1.msra.mxu0 0.0
    %643 = vmatprep.subr.mxu0 0.0
    %644 = vmatpush1.msra.mxu0 0.0
    %645 = vmatprep.subr.mxu0 0.0
    %646 = vmatpush1.msra.mxu0 0.0
    %647 = vmatprep.subr.mxu0 0.0
    %648 = vmatpush1.msra.mxu0 0.0
    %649 = vmatprep.subr.mxu0 0.0
    %650 = vmatpush1.msra.mxu0 0.0
    %651 = vmatprep.subr.mxu0 0.0
    %652 = vmatpush1.msra.mxu0 0.0
    %653 = vmatprep.subr.mxu0 0.0
    %654 = vmatpush1.msra.mxu0 0.0
    %655 = vmatprep.subr.mxu0 0.0
    %656 = vmatpush1.msra.mxu0 0.0
    %657 = vmatprep.subr.mxu0 0.0
    %658 = vmatpush1.msra.mxu0 0.0
    %659 = vmatprep.subr.mxu0 0.0
    %660 = vmatpush1.msra.mxu0 0.0
    %661 = vmatprep.subr.mxu0 0.0
    %662 = vmatpush1.msra.mxu0 0.0
    %663 = vmatprep.subr.mxu0 0.0
    %664 = vmatpush1.msra.mxu0 0.0
    %665 = vmatprep.subr.mxu0 0.0
    %666 = vmatpush1.msra.mxu0 0.0
    %667 = vmatprep.subr.mxu0 0.0
    %668 = vmatpush1.msra.mxu0 0.0
    %669 = vmatprep.mubr.f32.mxu0 0.0
    %670 = vmatmul.mubr.f32.gmra.mrb[0].mxu0 %v597
    %v671 = vpop.f32.mrb[0].mxu0
    %v672 = vadd.f32 0.0, %v671
    %v673 = vpop.f32.mrb[0].mxu0
    %674 = vmatprep.mubr.f32.mxu0 0.0
    %675 = vmatmul.mubr.f32.gmra.mrb[0].mxu0 %v600
    %v676 = vpop.f32.mrb[0].mxu0
    %v677 = vadd.f32 0.0, %v676
    %v678 = vpop.f32.mrb[0].mxu0
    %679 = vmatprep.mubr.f32.mxu0 0.0
    %680 = vmatmul.mubr.f32.gmra.mrb[0].mxu0 %v603
    %v681 = vpop.f32.mrb[0].mxu0
    %v682 = vadd.f32 0.0, %v681
    %v683 = vpop.f32.mrb[0].mxu0
    %684 = vdwg.mxu0
    %v685 = vadd.f32 %v593, %v672
    %v686 = vadd.f32 %v594, %v677
    %v687 = vadd.f32 %v595, %v682
    %v689 = vsel %vm503, %v119, 0
    %v692 = vsel %vm503, %v120, 0
    %v695 = vsel %vm503, %v121, 0
    %697 = vmatprep.subr.mxu0 0.0
    %698 = vmatpush1.msra.mxu0 %v396
    %699 = vmatprep.subr.mxu0 0.0
    %700 = vmatpush1.msra.mxu0 %v402
    %701 = vmatprep.subr.mxu0 0.0
    %702 = vmatpush1.msra.mxu0 %v408
    %703 = vmatprep.subr.mxu0 0.0
    %704 = vmatpush1.msra.mxu0 0.0
    %705 = vmatprep.subr.mxu0 0.0
    %706 = vmatpush1.msra.mxu0 0.0
    %707 = vmatprep.subr.mxu0 0.0
    %708 = vmatpush1.msra.mxu0 0.0
    %709 = vmatprep.subr.mxu0 0.0
    %710 = vmatpush1.msra.mxu0 0.0
    %711 = vmatprep.subr.mxu0 0.0
    %712 = vmatpush1.msra.mxu0 0.0
    %713 = vmatprep.subr.mxu0 0.0
    %714 = vmatpush1.msra.mxu0 0.0
    %715 = vmatprep.subr.mxu0 0.0
    %716 = vmatpush1.msra.mxu0 0.0
    %717 = vmatprep.subr.mxu0 0.0
    %718 = vmatpush1.msra.mxu0 0.0
    %719 = vmatprep.subr.mxu0 0.0
    %720 = vmatpush1.msra.mxu0 0.0
    %721 = vmatprep.subr.mxu0 0.0
    %722 = vmatpush1.msra.mxu0 0.0
    %723 = vmatprep.subr.mxu0 0.0
    %724 = vmatpush1.msra.mxu0 0.0
    %725 = vmatprep.subr.mxu0 0.0
    %726 = vmatpush1.msra.mxu0 0.0
    %727 = vmatprep.subr.mxu0 0.0
    %728 = vmatpush1.msra.mxu0 0.0
    %729 = vmatprep.subr.mxu0 0.0
    %730 = vmatpush1.msra.mxu0 0.0
    %731 = vmatprep.subr.mxu0 0.0
    %732 = vmatpush1.msra.mxu0 0.0
    %733 = vmatprep.subr.mxu0 0.0
    %734 = vmatpush1.msra.mxu0 0.0
    %735 = vmatprep.subr.mxu0 0.0
    %736 = vmatpush1.msra.mxu0 0.0
    %737 = vmatprep.subr.mxu0 0.0
    %738 = vmatpush1.msra.mxu0 0.0
    %739 = vmatprep.subr.mxu0 0.0
    %740 = vmatpush1.msra.mxu0 0.0
    %741 = vmatprep.subr.mxu0 0.0
    %742 = vmatpush1.msra.mxu0 0.0
    %743 = vmatprep.subr.mxu0 0.0
    %744 = vmatpush1.msra.mxu0 0.0
    %745 = vmatprep.subr.mxu0 0.0
    %746 = vmatpush1.msra.mxu0 0.0
    %747 = vmatprep.subr.mxu0 0.0
    %748 = vmatpush1.msra.mxu0 0.0
    %749 = vmatprep.subr.mxu0 0.0
    %750 = vmatpush1.msra.mxu0 0.0
    %751 = vmatprep.subr.mxu0 0.0
    %752 = vmatpush1.msra.mxu0 0.0
    %753 = vmatprep.subr.mxu0 0.0
    %754 = vmatpush1.msra.mxu0 0.0
    %755 = vmatprep.subr.mxu0 0.0
    %756 = vmatpush1.msra.mxu0 0.0
    %757 = vmatprep.subr.mxu0 0.0
    %758 = vmatpush1.msra.mxu0 0.0
    %759 = vmatprep.subr.mxu0 0.0
    %760 = vmatpush1.msra.mxu0 0.0
    %761 = vmatprep.mubr.f32.mxu0 0.0
    %762 = vmatmul.mubr.f32.gmra.mrb[0].mxu0 %v689
    %v763 = vpop.f32.mrb[0].mxu0
    %v764 = vadd.f32 0.0, %v763
    %v765 = vpop.f32.mrb[0].mxu0
    %766 = vmatprep.mubr.f32.mxu0 0.0
    %767 = vmatmul.mubr.f32.gmra.mrb[0].mxu0 %v692
    %v768 = vpop.f32.mrb[0].mxu0
    %v769 = vadd.f32 0.0, %v768
    %v770 = vpop.f32.mrb[0].mxu0
    %771 = vmatprep.mubr.f32.mxu0 0.0
    %772 = vmatmul.mubr.f32.gmra.mrb[0].mxu0 %v695
    %v773 = vpop.f32.mrb[0].mxu0
    %v774 = vadd.f32 0.0, %v773
    %v775 = vpop.f32.mrb[0].mxu0
    %776 = vdwg.mxu0
    %v777 = vadd.f32 %v685, %v764
    %v778 = vadd.f32 %v686, %v769
    %v779 = vadd.f32 %v687, %v774
    %v781 = vsel %vm503, %v122, 0
    %v784 = vsel %vm503, %v123, 0
    %v787 = vsel %vm503, %v124, 0
    %789 = vmatprep.subr.mxu0 0.0
    %790 = vmatpush1.msra.mxu0 %v477
    %791 = vmatprep.subr.mxu0 0.0
    %792 = vmatpush1.msra.mxu0 %v483
    %793 = vmatprep.subr.mxu0 0.0
    %794 = vmatpush1.msra.mxu0 %v489
    %795 = vmatprep.subr.mxu0 0.0
    %796 = vmatpush1.msra.mxu0 0.0
    %797 = vmatprep.subr.mxu0 0.0
    %798 = vmatpush1.msra.mxu0 0.0
    %799 = vmatprep.subr.mxu0 0.0
    %800 = vmatpush1.msra.mxu0 0.0
    %801 = vmatprep.subr.mxu0 0.0
    %802 = vmatpush1.msra.mxu0 0.0
    %803 = vmatprep.subr.mxu0 0.0
    %804 = vmatpush1.msra.mxu0 0.0
    %805 = vmatprep.subr.mxu0 0.0
    %806 = vmatpush1.msra.mxu0 0.0
    %807 = vmatprep.subr.mxu0 0.0
    %808 = vmatpush1.msra.mxu0 0.0
    %809 = vmatprep.subr.mxu0 0.0
    %810 = vmatpush1.msra.mxu0 0.0
    %811 = vmatprep.subr.mxu0 0.0
    %812 = vmatpush1.msra.mxu0 0.0
    %813 = vmatprep.subr.mxu0 0.0
    %814 = vmatpush1.msra.mxu0 0.0
    %815 = vmatprep.subr.mxu0 0.0
    %816 = vmatpush1.msra.mxu0 0.0
    %817 = vmatprep.subr.mxu0 0.0
    %818 = vmatpush1.msra.mxu0 0.0
    %819 = vmatprep.subr.mxu0 0.0
    %820 = vmatpush1.msra.mxu0 0.0
    %821 = vmatprep.subr.mxu0 0.0
    %822 = vmatpush1.msra.mxu0 0.0
    %823 = vmatprep.subr.mxu0 0.0
    %824 = vmatpush1.msra.mxu0 0.0
    %825 = vmatprep.subr.mxu0 0.0
    %826 = vmatpush1.msra.mxu0 0.0
    %827 = vmatprep.subr.mxu0 0.0
    %828 = vmatpush1.msra.mxu0 0.0
    %829 = vmatprep.subr.mxu0 0.0
    %830 = vmatpush1.msra.mxu0 0.0
    %831 = vmatprep.subr.mxu0 0.0
    %832 = vmatpush1.msra.mxu0 0.0
    %833 = vmatprep.subr.mxu0 0.0
    %834 = vmatpush1.msra.mxu0 0.0
    %835 = vmatprep.subr.mxu0 0.0
    %836 = vmatpush1.msra.mxu0 0.0
    %837 = vmatprep.subr.mxu0 0.0
    %838 = vmatpush1.msra.mxu0 0.0
    %839 = vmatprep.subr.mxu0 0.0
    %840 = vmatpush1.msra.mxu0 0.0
    %841 = vmatprep.subr.mxu0 0.0
    %842 = vmatpush1.msra.mxu0 0.0
    %843 = vmatprep.subr.mxu0 0.0
    %844 = vmatpush1.msra.mxu0 0.0
    %845 = vmatprep.subr.mxu0 0.0
    %846 = vmatpush1.msra.mxu0 0.0
    %847 = vmatprep.subr.mxu0 0.0
    %848 = vmatpush1.msra.mxu0 0.0
    %849 = vmatprep.subr.mxu0 0.0
    %850 = vmatpush1.msra.mxu0 0.0
    %851 = vmatprep.subr.mxu0 0.0
    %852 = vmatpush1.msra.mxu0 0.0
    %853 = vmatprep.mubr.f32.mxu0 0.0
    %854 = vmatmul.mubr.f32.gmra.mrb[0].mxu0 %v781
    %v855 = vpop.f32.mrb[0].mxu0
    %v856 = vadd.f32 0.0, %v855
    %v857 = vpop.f32.mrb[0].mxu0
    %858 = vmatprep.mubr.f32.mxu0 0.0
    %859 = vmatmul.mubr.f32.gmra.mrb[0].mxu0 %v784
    %v860 = vpop.f32.mrb[0].mxu0
    %v861 = vadd.f32 0.0, %v860
    %v862 = vpop.f32.mrb[0].mxu0
    %863 = vmatprep.mubr.f32.mxu0 0.0
    %864 = vmatmul.mubr.f32.gmra.mrb[0].mxu0 %v787
    %v865 = vpop.f32.mrb[0].mxu0
    %v866 = vadd.f32 0.0, %v865
    %v867 = vpop.f32.mrb[0].mxu0
    %868 = vdwg.mxu0
    %v869 = vadd.f32 %v777, %v856
    %v870 = vadd.f32 %v778, %v861
    %v871 = vadd.f32 %v779, %v866
    %v873 = vsel %vm503, %v125, 0
    %v876 = vsel %vm503, %v126, 0
    %v879 = vsel %vm503, %v127, 0
    %881 = vmatprep.subr.mxu0 0.0
    %882 = vmatpush1.msra.mxu0 %v479
    %883 = vmatprep.subr.mxu0 0.0
    %884 = vmatpush1.msra.mxu0 %v485
    %885 = vmatprep.subr.mxu0 0.0
    %886 = vmatpush1.msra.mxu0 %v491
    %887 = vmatprep.subr.mxu0 0.0
    %888 = vmatpush1.msra.mxu0 0.0
    %889 = vmatprep.subr.mxu0 0.0
    %890 = vmatpush1.msra.mxu0 0.0
    %891 = vmatprep.subr.mxu0 0.0
    %892 = vmatpush1.msra.mxu0 0.0
    %893 = vmatprep.subr.mxu0 0.0
    %894 = vmatpush1.msra.mxu0 0.0
    %895 = vmatprep.subr.mxu0 0.0
    %896 = vmatpush1.msra.mxu0 0.0
    %897 = vmatprep.subr.mxu0 0.0
    %898 = vmatpush1.msra.mxu0 0.0
    %899 = vmatprep.subr.mxu0 0.0
    %900 = vmatpush1.msra.mxu0 0.0
    %901 = vmatprep.subr.mxu0 0.0
    %902 = vmatpush1.msra.mxu0 0.0
    %903 = vmatprep.subr.mxu0 0.0
    %904 = vmatpush1.msra.mxu0 0.0
    %905 = vmatprep.subr.mxu0 0.0
    %906 = vmatpush1.msra.mxu0 0.0
    %907 = vmatprep.subr.mxu0 0.0
    %908 = vmatpush1.msra.mxu0 0.0
    %909 = vmatprep.subr.mxu0 0.0
    %910 = vmatpush1.msra.mxu0 0.0
    %911 = vmatprep.subr.mxu0 0.0
    %912 = vmatpush1.msra.mxu0 0.0
    %913 = vmatprep.subr.mxu0 0.0
    %914 = vmatpush1.msra.mxu0 0.0
    %915 = vmatprep.subr.mxu0 0.0
    %916 = vmatpush1.msra.mxu0 0.0
    %917 = vmatprep.subr.mxu0 0.0
    %918 = vmatpush1.msra.mxu0 0.0
    %919 = vmatprep.subr.mxu0 0.0
    %920 = vmatpush1.msra.mxu0 0.0
    %921 = vmatprep.subr.mxu0 0.0
    %922 = vmatpush1.msra.mxu0 0.0
    %923 = vmatprep.subr.mxu0 0.0
    %924 = vmatpush1.msra.mxu0 0.0
    %925 = vmatprep.subr.mxu0 0.0
    %926 = vmatpush1.msra.mxu0 0.0
    %927 = vmatprep.subr.mxu0 0.0
    %928 = vmatpush1.msra.mxu0 0.0
    %929 = vmatprep.subr.mxu0 0.0
    %930 = vmatpush1.msra.mxu0 0.0
    %931 = vmatprep.subr.mxu0 0.0
    %932 = vmatpush1.msra.mxu0 0.0
    %933 = vmatprep.subr.mxu0 0.0
    %934 = vmatpush1.msra.mxu0 0.0
    %935 = vmatprep.subr.mxu0 0.0
    %936 = vmatpush1.msra.mxu0 0.0
    %937 = vmatprep.subr.mxu0 0.0
    %938 = vmatpush1.msra.mxu0 0.0
    %939 = vmatprep.subr.mxu0 0.0
    %940 = vmatpush1.msra.mxu0 0.0
    %941 = vmatprep.subr.mxu0 0.0
    %942 = vmatpush1.msra.mxu0 0.0
    %943 = vmatprep.subr.mxu0 0.0
    %944 = vmatpush1.msra.mxu0 0.0
    %945 = vmatprep.mubr.f32.mxu0 0.0
    %946 = vmatmul.mubr.f32.gmra.mrb[0].mxu0 %v873
    %v947 = vpop.f32.mrb[0].mxu0
    %v948 = vadd.f32 0.0, %v947
    %v949 = vpop.f32.mrb[0].mxu0
    %950 = vmatprep.mubr.f32.mxu0 0.0
    %951 = vmatmul.mubr.f32.gmra.mrb[0].mxu0 %v876
    %v952 = vpop.f32.mrb[0].mxu0
    %v953 = vadd.f32 0.0, %v952
    %v954 = vpop.f32.mrb[0].mxu0
    %955 = vmatprep.mubr.f32.mxu0 0.0
    %956 = vmatmul.mubr.f32.gmra.mrb[0].mxu0 %v879
    %v957 = vpop.f32.mrb[0].mxu0
    %v958 = vadd.f32 0.0, %v957
    %v959 = vpop.f32.mrb[0].mxu0
    %960 = vdwg.mxu0
    %v961 = vadd.f32 %v869, %v948
    %v962 = vadd.f32 %v870, %v953
    %v963 = vadd.f32 %v871, %v958
    %v964 = vtanh.pop %v961
    %v965 = vtanh.pop %v962
    %v966 = vtanh.pop %v963
    %v967 = vld [vmem:[#allocation7] sm:$0xff]
    %v968 = vld [vmem:[#allocation7 + $0x8] sm:$0xff]
    %v969 = vld [vmem:[#allocation7 + $0x10] sm:$0xff]
    %v970 = vld [vmem:[#allocation7 + $0x18] sm:$0xff]
    %v971 = vld [vmem:[#allocation7 + $0x20] sm:$0xff]
    %v972 = vld [vmem:[#allocation7 + $0x28] sm:$0xff]
    %v973 = vld [vmem:[#allocation7 + $0x30] sm:$0xff]
    %v974 = vld [vmem:[#allocation7 + $0x38] sm:$0xff]
    %v975 = vld [vmem:[#allocation7 + $0x40] sm:$0xff]
    %v976 = vld [vmem:[#allocation7 + $0x48] sm:$0xff]
    %v977 = vld [vmem:[#allocation7 + $0x50] sm:$0xff]
    %v978 = vld [vmem:[#allocation7 + $0x58] sm:$0xff]
    %v979 = vld [vmem:[#allocation7 + $0x60] sm:$0xff]
    %v980 = vld [vmem:[#allocation7 + $0x68] sm:$0xff]
    %v981 = vld [vmem:[#allocation7 + $0x70] sm:$0xff]
    %v982 = vld [vmem:[#allocation7 + $0x78] sm:$0xff]
    %v983 = vld [vmem:[#allocation7 + $0x80] sm:$0xff]
    %v984 = vld [vmem:[#allocation7 + $0x88] sm:$0xff]
    %v985 = vld [vmem:[#allocation7 + $0x90] sm:$0xff]
    %v986 = vld [vmem:[#allocation7 + $0x98] sm:$0xff]
    %v987 = vld [vmem:[#allocation7 + $0xa0] sm:$0xff]
    %v988 = vld [vmem:[#allocation7 + $0xa8] sm:$0xff]
    %v989 = vld [vmem:[#allocation7 + $0xb0] sm:$0xff]
    %v990 = vld [vmem:[#allocation7 + $0xb8] sm:$0xff]
    %v991 = vld [vmem:[#allocation7 + $0xc0] sm:$0xff]
    %v992 = vld [vmem:[#allocation7 + $0xc8] sm:$0xff]
    %v993 = vld [vmem:[#allocation7 + $0xd0] sm:$0xff]
    %v994 = vld [vmem:[#allocation7 + $0xd8] sm:$0xff]
    %v995 = vld [vmem:[#allocation7 + $0xe0] sm:$0xff]
    %v996 = vld [vmem:[#allocation7 + $0xe8] sm:$0xff]
    %v997 = vld [vmem:[#allocation7 + $0xf0] sm:$0xff]
    %v998 = vld [vmem:[#allocation7 + $0xf8] sm:$0xff]
    %v999 = vld [vmem:[#allocation7 + $0x100] sm:$0xff]
    %v1000 = vld [vmem:[#allocation7 + $0x108] sm:$0xff]
    %v1001 = vld [vmem:[#allocation7 + $0x110] sm:$0xff]
    %v1002 = vld [vmem:[#allocation7 + $0x118] sm:$0xff]
    %v1003 = vld [vmem:[#allocation7 + $0x120] sm:$0xff]
    %v1004 = vld [vmem:[#allocation7 + $0x128] sm:$0xff]
    %v1005 = vld [vmem:[#allocation7 + $0x130] sm:$0xff]
    %v1006 = vld [vmem:[#allocation7 + $0x138] sm:$0xff]
    %v1007 = vld [vmem:[#allocation7 + $0x140] sm:$0xff]
    %v1008 = vld [vmem:[#allocation7 + $0x148] sm:$0xff]
    %v1009 = vld [vmem:[#allocation7 + $0x150] sm:$0xff]
    %v1010 = vld [vmem:[#allocation7 + $0x158] sm:$0xff]
    %v1011 = vld [vmem:[#allocation7 + $0x160] sm:$0xff]
    %v1012 = vld [vmem:[#allocation7 + $0x168] sm:$0xff]
    %v1013 = vld [vmem:[#allocation7 + $0x170] sm:$0xff]
    %v1014 = vld [vmem:[#allocation7 + $0x178] sm:$0xff]
    %1015 = vmatprep.subr.mxu0 %v968
    %1016 = vmatpush1.msra.mxu0 %v967
    %1017 = vmatprep.subr.mxu0 %v971
    %1018 = vmatpush1.msra.mxu0 %v970
    %1019 = vmatprep.subr.mxu0 %v974
    %1020 = vmatpush1.msra.mxu0 %v973
    %1021 = vmatprep.subr.mxu0 %v977
    %1022 = vmatpush1.msra.mxu0 %v976
    %1023 = vmatprep.subr.mxu0 %v980
    %1024 = vmatpush1.msra.mxu0 %v979
    %1025 = vmatprep.subr.mxu0 %v983
    %1026 = vmatpush1.msra.mxu0 %v982
    %1027 = vmatprep.subr.mxu0 %v986
    %1028 = vmatpush1.msra.mxu0 %v985
    %1029 = vmatprep.subr.mxu0 %v989
    %1030 = vmatpush1.msra.mxu0 %v988
    %1031 = vmatprep.subr.mxu0 %v992
    %1032 = vmatpush1.msra.mxu0 %v991
    %1033 = vmatprep.subr.mxu0 %v995
    %1034 = vmatpush1.msra.mxu0 %v994
    %1035 = vmatprep.subr.mxu0 %v998
    %1036 = vmatpush1.msra.mxu0 %v997
    %1037 = vmatprep.subr.mxu0 %v1001
    %1038 = vmatpush1.msra.mxu0 %v1000
    %1039 = vmatprep.subr.mxu0 %v1004
    %1040 = vmatpush1.msra.mxu0 %v1003
    %1041 = vmatprep.subr.mxu0 %v1007
    %1042 = vmatpush1.msra.mxu0 %v1006
    %1043 = vmatprep.subr.mxu0 %v1010
    %1044 = vmatpush1.msra.mxu0 %v1009
    %1045 = vmatprep.subr.mxu0 %v1013
    %1046 = vmatpush1.msra.mxu0 %v1012
    %1047 = vmatprep.subr.mxu0 0.0
    %1048 = vmatpush1.msra.mxu0 0.0
    %1049 = vmatprep.subr.mxu0 0.0
    %1050 = vmatpush1.msra.mxu0 0.0
    %1051 = vmatprep.subr.mxu0 0.0
    %1052 = vmatpush1.msra.mxu0 0.0
    %1053 = vmatprep.subr.mxu0 0.0
    %1054 = vmatpush1.msra.mxu0 0.0
    %1055 = vmatprep.subr.mxu0 0.0
    %1056 = vmatpush1.msra.mxu0 0.0
    %1057 = vmatprep.subr.mxu0 0.0
    %1058 = vmatpush1.msra.mxu0 0.0
    %1059 = vmatprep.subr.mxu0 0.0
    %1060 = vmatpush1.msra.mxu0 0.0
    %1061 = vmatprep.subr.mxu0 0.0
    %1062 = vmatpush1.msra.mxu0 0.0
    %1063 = vmatprep.subr.mxu0 0.0
    %1064 = vmatpush1.msra.mxu0 0.0
    %1065 = vmatprep.subr.mxu0 0.0
    %1066 = vmatpush1.msra.mxu0 0.0
    %1067 = vmatprep.subr.mxu0 0.0
    %1068 = vmatpush1.msra.mxu0 0.0
    %1069 = vmatprep.subr.mxu0 0.0
    %1070 = vmatpush1.msra.mxu0 0.0
    %1071 = vmatprep.subr.mxu0 0.0
    %1072 = vmatpush1.msra.mxu0 0.0
    %1073 = vmatprep.subr.mxu0 0.0
    %1074 = vmatpush1.msra.mxu0 0.0
    %1075 = vmatprep.subr.mxu0 0.0
    %1076 = vmatpush1.msra.mxu0 0.0
    %1077 = vmatprep.subr.mxu0 0.0
    %1078 = vmatpush1.msra.mxu0 0.0
    %1079 = vmatprep.mubr.f32.mxu0 0.0
    %1080 = vmatmul.mubr.f32.gmra.mrb[0].mxu0 %v964
    %v1081 = vpop.f32.mrb[0].mxu0
    %v1082 = vadd.f32 0.0, %v1081
    %v1083 = vpop.f32.mrb[0].mxu0
    %v1084 = vadd.f32 0.0, %v1083
    %1085 = vmatprep.mubr.f32.mxu0 0.0
    %1086 = vmatmul.mubr.f32.gmra.mrb[0].mxu0 %v965
    %v1087 = vpop.f32.mrb[0].mxu0
    %v1088 = vadd.f32 0.0, %v1087
    %v1089 = vpop.f32.mrb[0].mxu0
    %v1090 = vadd.f32 0.0, %v1089
    %1091 = vmatprep.mubr.f32.mxu0 0.0
    %1092 = vmatmul.mubr.f32.gmra.mrb[0].mxu0 %v966
    %v1093 = vpop.f32.mrb[0].mxu0
    %v1094 = vadd.f32 0.0, %v1093
    %v1095 = vpop.f32.mrb[0].mxu0
    %v1096 = vadd.f32 0.0, %v1095
    %1097 = vdwg.mxu0
    %1098 = vmatprep.subr.mxu0 0.0
    %1099 = vmatpush1.msra.mxu0 %v969
    %1100 = vmatprep.subr.mxu0 0.0
    %1101 = vmatpush1.msra.mxu0 %v972
    %1102 = vmatprep.subr.mxu0 0.0
    %1103 = vmatpush1.msra.mxu0 %v975
    %1104 = vmatprep.subr.mxu0 0.0
    %1105 = vmatpush1.msra.mxu0 %v978
    %1106 = vmatprep.subr.mxu0 0.0
    %1107 = vmatpush1.msra.mxu0 %v981
    %1108 = vmatprep.subr.mxu0 0.0
    %1109 = vmatpush1.msra.mxu0 %v984
    %1110 = vmatprep.subr.mxu0 0.0
    %1111 = vmatpush1.msra.mxu0 %v987
    %1112 = vmatprep.subr.mxu0 0.0
    %1113 = vmatpush1.msra.mxu0 %v990
    %1114 = vmatprep.subr.mxu0 0.0
    %1115 = vmatpush1.msra.mxu0 %v993
    %1116 = vmatprep.subr.mxu0 0.0
    %1117 = vmatpush1.msra.mxu0 %v996
    %1118 = vmatprep.subr.mxu0 0.0
    %1119 = vmatpush1.msra.mxu0 %v999
    %1120 = vmatprep.subr.mxu0 0.0
    %1121 = vmatpush1.msra.mxu0 %v1002
    %1122 = vmatprep.subr.mxu0 0.0
    %1123 = vmatpush1.msra.mxu0 %v1005
    %1124 = vmatprep.subr.mxu0 0.0
    %1125 = vmatpush1.msra.mxu0 %v1008
    %1126 = vmatprep.subr.mxu0 0.0
    %1127 = vmatpush1.msra.mxu0 %v1011
    %1128 = vmatprep.subr.mxu0 0.0
    %1129 = vmatpush1.msra.mxu0 %v1014
    %1130 = vmatprep.subr.mxu0 0.0
    %1131 = vmatpush1.msra.mxu0 0.0
    %1132 = vmatprep.subr.mxu0 0.0
    %1133 = vmatpush1.msra.mxu0 0.0
    %1134 = vmatprep.subr.mxu0 0.0
    %1135 = vmatpush1.msra.mxu0 0.0
    %1136 = vmatprep.subr.mxu0 0.0
    %1137 = vmatpush1.msra.mxu0 0.0
    %1138 = vmatprep.subr.mxu0 0.0
    %1139 = vmatpush1.msra.mxu0 0.0
    %1140 = vmatprep.subr.mxu0 0.0
    %1141 = vmatpush1.msra.mxu0 0.0
    %1142 = vmatprep.subr.mxu0 0.0
    %1143 = vmatpush1.msra.mxu0 0.0
    %1144 = vmatprep.subr.mxu0 0.0
    %1145 = vmatpush1.msra.mxu0 0.0
    %1146 = vmatprep.subr.mxu0 0.0
    %1147 = vmatpush1.msra.mxu0 0.0
    %1148 = vmatprep.subr.mxu0 0.0
    %1149 = vmatpush1.msra.mxu0 0.0
    %1150 = vmatprep.subr.mxu0 0.0
    %1151 = vmatpush1.msra.mxu0 0.0
    %1152 = vmatprep.subr.mxu0 0.0
    %1153 = vmatpush1.msra.mxu0 0.0
    %1154 = vmatprep.subr.mxu0 0.0
    %1155 = vmatpush1.msra.mxu0 0.0
    %1156 = vmatprep.subr.mxu0 0.0
    %1157 = vmatpush1.msra.mxu0 0.0
    %1158 = vmatprep.subr.mxu0 0.0
    %1159 = vmatpush1.msra.mxu0 0.0
    %1160 = vmatprep.subr.mxu0 0.0
    %1161 = vmatpush1.msra.mxu0 0.0
    %1162 = vmatprep.mubr.f32.mxu0 0.0
    %1163 = vmatmul.mubr.f32.gmra.mrb[0].mxu0 %v964
    %v1164 = vpop.f32.mrb[0].mxu0
    %v1165 = vadd.f32 0.0, %v1164
    %v1166 = vpop.f32.mrb[0].mxu0
    %1167 = vmatprep.mubr.f32.mxu0 0.0
    %1168 = vmatmul.mubr.f32.gmra.mrb[0].mxu0 %v965
    %v1169 = vpop.f32.mrb[0].mxu0
    %v1170 = vadd.f32 0.0, %v1169
    %v1171 = vpop.f32.mrb[0].mxu0
    %1172 = vmatprep.mubr.f32.mxu0 0.0
    %1173 = vmatmul.mubr.f32.gmra.mrb[0].mxu0 %v966
    %v1174 = vpop.f32.mrb[0].mxu0
    %v1175 = vadd.f32 0.0, %v1174
    %v1176 = vpop.f32.mrb[0].mxu0
    %1177 = vdwg.mxu0
    %v1178 = vld [vmem:[%s6] sm:$0x1]
    %v1180 = vlaneseq
    %v1181 = vshrl.u32 %v1180, 7
    %v1182 = vsub.s32 0, %v1181
    %v1183 = vrot.slane %v1178, %v1182
    %v1185 = vadd.f32 %v1082, %v1183
    %v1186 = vadd.f32 %v1088, %v1183
    %v1187 = vadd.f32 %v1094, %v1183
    %1191 = vrot.lane.b32.xlu0 %v1082, 64
    %v1192 = vpop.permute.xlu0 %1191
    %1193 = vrot.lane.b32.xlu0 %v1088, 64
    %v1194 = vpop.permute.xlu0 %1193
    %1195 = vrot.lane.b32.xlu0 %v1094, 64
    %v1196 = vpop.permute.xlu0 %1195
    %1200 = vmatprep.subr.mxu0 0.0
    %1201 = vmatpush1.msra.mxu0 %v1192
    %1202 = vmatprep.subr.mxu0 0.0
    %1203 = vmatpush1.msra.mxu0 %v1194
    %1204 = vmatprep.subr.mxu0 0.0
    %1205 = vmatpush1.msra.mxu0 %v1196
    %1206 = vmatprep.subr.mxu0 0.0
    %1207 = vmatpush1.msra.mxu0 0.0
    %1208 = vmatprep.subr.mxu0 0.0
    %1209 = vmatpush1.msra.mxu0 0.0
    %1210 = vmatprep.subr.mxu0 0.0
    %1211 = vmatpush1.msra.mxu0 0.0
    %1212 = vmatprep.subr.mxu0 0.0
    %1213 = vmatpush1.msra.mxu0 0.0
    %1214 = vmatprep.subr.mxu0 0.0
    %1215 = vmatpush1.msra.mxu0 0.0
    %1216 = vmatprep.subr.mxu0 0.0
    %1217 = vmatpush1.msra.mxu0 0.0
    %1218 = vmatprep.subr.mxu0 0.0
    %1219 = vmatpush1.msra.mxu0 0.0
    %1220 = vmatprep.subr.mxu0 0.0
    %1221 = vmatpush1.msra.mxu0 0.0
    %1222 = vmatprep.subr.mxu0 0.0
    %1223 = vmatpush1.msra.mxu0 0.0
    %1224 = vmatprep.subr.mxu0 0.0
    %1225 = vmatpush1.msra.mxu0 0.0
    %1226 = vmatprep.subr.mxu0 0.0
    %1227 = vmatpush1.msra.mxu0 0.0
    %1228 = vmatprep.subr.mxu0 0.0
    %1229 = vmatpush1.msra.mxu0 0.0
    %1230 = vmatprep.subr.mxu0 0.0
    %1231 = vmatpush1.msra.mxu0 0.0
    %1232 = vmatprep.subr.mxu0 0.0
    %1233 = vmatpush1.msra.mxu0 0.0
    %1234 = vmatprep.subr.mxu0 0.0
    %1235 = vmatpush1.msra.mxu0 0.0
    %1236 = vmatprep.subr.mxu0 0.0
    %1237 = vmatpush1.msra.mxu0 0.0
    %1238 = vmatprep.subr.mxu0 0.0
    %1239 = vmatpush1.msra.mxu0 0.0
    %1240 = vmatprep.subr.mxu0 0.0
    %1241 = vmatpush1.msra.mxu0 0.0
    %1242 = vmatprep.subr.mxu0 0.0
    %1243 = vmatpush1.msra.mxu0 0.0
    %1244 = vmatprep.subr.mxu0 0.0
    %1245 = vmatpush1.msra.mxu0 0.0
    %1246 = vmatprep.subr.mxu0 0.0
    %1247 = vmatpush1.msra.mxu0 0.0
    %1248 = vmatprep.subr.mxu0 0.0
    %1249 = vmatpush1.msra.mxu0 0.0
    %1250 = vmatprep.subr.mxu0 0.0
    %1251 = vmatpush1.msra.mxu0 0.0
    %1252 = vmatprep.subr.mxu0 0.0
    %1253 = vmatpush1.msra.mxu0 0.0
    %1254 = vmatprep.subr.mxu0 0.0
    %1255 = vmatpush1.msra.mxu0 0.0
    %1256 = vmatprep.subr.mxu0 0.0
    %1257 = vmatpush1.msra.mxu0 0.0
    %1258 = vmatprep.subr.mxu0 0.0
    %1259 = vmatpush1.msra.mxu0 0.0
    %1260 = vmatprep.subr.mxu0 0.0
    %1261 = vmatpush1.msra.mxu0 0.0
    %1262 = vmatprep.subr.mxu0 0.0
    %1263 = vmatpush1.msra.mxu0 0.0
    %1264 = vmatprep.mubr.f32.mxu0 0.0
    %1265 = vmatmul.mubr.f32.gmra.mrb[0].mxu0 %v505
    %v1266 = vpop.f32.mrb[0].mxu0
    %v1267 = vadd.f32 0.0, %v1266
    %v1268 = vpop.f32.mrb[0].mxu0
    %1269 = vmatprep.mubr.f32.mxu0 0.0
    %1270 = vmatmul.mubr.f32.gmra.mrb[0].mxu0 %v508
    %v1271 = vpop.f32.mrb[0].mxu0
    %v1272 = vadd.f32 0.0, %v1271
    %v1273 = vpop.f32.mrb[0].mxu0
    %1274 = vmatprep.mubr.f32.mxu0 0.0
    %1275 = vmatmul.mubr.f32.gmra.mrb[0].mxu0 %v511
    %v1276 = vpop.f32.mrb[0].mxu0
    %v1277 = vadd.f32 0.0, %v1276
    %v1278 = vpop.f32.mrb[0].mxu0
    %1279 = vdwg.mxu0
    %v1280 = vadd.f32 %v1185, %v1267
    %v1281 = vadd.f32 %v1186, %v1272
    %v1282 = vadd.f32 %v1187, %v1277
    %1283 = vmatprep.subr.mxu0 0.0
    %1284 = vmatpush1.msra.mxu0 %v1084
    %1285 = vmatprep.subr.mxu0 0.0
    %1286 = vmatpush1.msra.mxu0 %v1090
    %1287 = vmatprep.subr.mxu0 0.0
    %1288 = vmatpush1.msra.mxu0 %v1096
    %1289 = vmatprep.subr.mxu0 0.0
    %1290 = vmatpush1.msra.mxu0 0.0
    %1291 = vmatprep.subr.mxu0 0.0
    %1292 = vmatpush1.msra.mxu0 0.0
    %1293 = vmatprep.subr.mxu0 0.0
    %1294 = vmatpush1.msra.mxu0 0.0
    %1295 = vmatprep.subr.mxu0 0.0
    %1296 = vmatpush1.msra.mxu0 0.0
    %1297 = vmatprep.subr.mxu0 0.0
    %1298 = vmatpush1.msra.mxu0 0.0
    %1299 = vmatprep.subr.mxu0 0.0
    %1300 = vmatpush1.msra.mxu0 0.0
    %1301 = vmatprep.subr.mxu0 0.0
    %1302 = vmatpush1.msra.mxu0 0.0
    %1303 = vmatprep.subr.mxu0 0.0
    %1304 = vmatpush1.msra.mxu0 0.0
    %1305 = vmatprep.subr.mxu0 0.0
    %1306 = vmatpush1.msra.mxu0 0.0
    %1307 = vmatprep.subr.mxu0 0.0
    %1308 = vmatpush1.msra.mxu0 0.0
    %1309 = vmatprep.subr.mxu0 0.0
    %1310 = vmatpush1.msra.mxu0 0.0
    %1311 = vmatprep.subr.mxu0 0.0
    %1312 = vmatpush1.msra.mxu0 0.0
    %1313 = vmatprep.subr.mxu0 0.0
    %1314 = vmatpush1.msra.mxu0 0.0
    %1315 = vmatprep.subr.mxu0 0.0
    %1316 = vmatpush1.msra.mxu0 0.0
    %1317 = vmatprep.subr.mxu0 0.0
    %1318 = vmatpush1.msra.mxu0 0.0
    %1319 = vmatprep.subr.mxu0 0.0
    %1320 = vmatpush1.msra.mxu0 0.0
    %1321 = vmatprep.subr.mxu0 0.0
    %1322 = vmatpush1.msra.mxu0 0.0
    %1323 = vmatprep.subr.mxu0 0.0
    %1324 = vmatpush1.msra.mxu0 0.0
    %1325 = vmatprep.subr.mxu0 0.0
    %1326 = vmatpush1.msra.mxu0 0.0
    %1327 = vmatprep.subr.mxu0 0.0
    %1328 = vmatpush1.msra.mxu0 0.0
    %1329 = vmatprep.subr.mxu0 0.0
    %1330 = vmatpush1.msra.mxu0 0.0
    %1331 = vmatprep.subr.mxu0 0.0
    %1332 = vmatpush1.msra.mxu0 0.0
    %1333 = vmatprep.subr.mxu0 0.0
    %1334 = vmatpush1.msra.mxu0 0.0
    %1335 = vmatprep.subr.mxu0 0.0
    %1336 = vmatpush1.msra.mxu0 0.0
    %1337 = vmatprep.subr.mxu0 0.0
    %1338 = vmatpush1.msra.mxu0 0.0
    %1339 = vmatprep.subr.mxu0 0.0
    %1340 = vmatpush1.msra.mxu0 0.0
    %1341 = vmatprep.subr.mxu0 0.0
    %1342 = vmatpush1.msra.mxu0 0.0
    %1343 = vmatprep.subr.mxu0 0.0
    %1344 = vmatpush1.msra.mxu0 0.0
    %1345 = vmatprep.subr.mxu0 0.0
    %1346 = vmatpush1.msra.mxu0 0.0
    %1347 = vmatprep.mubr.f32.mxu0 0.0
    %1348 = vmatmul.mubr.f32.gmra.mrb[0].mxu0 %v597
    %v1349 = vpop.f32.mrb[0].mxu0
    %v1350 = vadd.f32 0.0, %v1349
    %v1351 = vpop.f32.mrb[0].mxu0
    %1352 = vmatprep.mubr.f32.mxu0 0.0
    %1353 = vmatmul.mubr.f32.gmra.mrb[0].mxu0 %v600
    %v1354 = vpop.f32.mrb[0].mxu0
    %v1355 = vadd.f32 0.0, %v1354
    %v1356 = vpop.f32.mrb[0].mxu0
    %1357 = vmatprep.mubr.f32.mxu0 0.0
    %1358 = vmatmul.mubr.f32.gmra.mrb[0].mxu0 %v603
    %v1359 = vpop.f32.mrb[0].mxu0
    %v1360 = vadd.f32 0.0, %v1359
    %v1361 = vpop.f32.mrb[0].mxu0
    %1362 = vdwg.mxu0
    %v1363 = vadd.f32 %v1280, %v1350
    %v1364 = vadd.f32 %v1281, %v1355
    %v1365 = vadd.f32 %v1282, %v1360
    %1369 = vrot.lane.b32.xlu0 %v1084, 64
    %v1370 = vpop.permute.xlu0 %1369
    %1371 = vrot.lane.b32.xlu0 %v1090, 64
    %v1372 = vpop.permute.xlu0 %1371
    %1373 = vrot.lane.b32.xlu0 %v1096, 64
    %v1374 = vpop.permute.xlu0 %1373
    %1378 = vmatprep.subr.mxu0 0.0
    %1379 = vmatpush1.msra.mxu0 %v1370
    %1380 = vmatprep.subr.mxu0 0.0
    %1381 = vmatpush1.msra.mxu0 %v1372
    %1382 = vmatprep.subr.mxu0 0.0
    %1383 = vmatpush1.msra.mxu0 %v1374
    %1384 = vmatprep.subr.mxu0 0.0
    %1385 = vmatpush1.msra.mxu0 0.0
    %1386 = vmatprep.subr.mxu0 0.0
    %1387 = vmatpush1.msra.mxu0 0.0
    %1388 = vmatprep.subr.mxu0 0.0
    %1389 = vmatpush1.msra.mxu0 0.0
    %1390 = vmatprep.subr.mxu0 0.0
    %1391 = vmatpush1.msra.mxu0 0.0
    %1392 = vmatprep.subr.mxu0 0.0
    %1393 = vmatpush1.msra.mxu0 0.0
    %1394 = vmatprep.subr.mxu0 0.0
    %1395 = vmatpush1.msra.mxu0 0.0
    %1396 = vmatprep.subr.mxu0 0.0
    %1397 = vmatpush1.msra.mxu0 0.0
    %1398 = vmatprep.subr.mxu0 0.0
    %1399 = vmatpush1.msra.mxu0 0.0
    %1400 = vmatprep.subr.mxu0 0.0
    %1401 = vmatpush1.msra.mxu0 0.0
    %1402 = vmatprep.subr.mxu0 0.0
    %1403 = vmatpush1.msra.mxu0 0.0
    %1404 = vmatprep.subr.mxu0 0.0
    %1405 = vmatpush1.msra.mxu0 0.0
    %1406 = vmatprep.subr.mxu0 0.0
    %1407 = vmatpush1.msra.mxu0 0.0
    %1408 = vmatprep.subr.mxu0 0.0
    %1409 = vmatpush1.msra.mxu0 0.0
    %1410 = vmatprep.subr.mxu0 0.0
    %1411 = vmatpush1.msra.mxu0 0.0
    %1412 = vmatprep.subr.mxu0 0.0
    %1413 = vmatpush1.msra.mxu0 0.0
    %1414 = vmatprep.subr.mxu0 0.0
    %1415 = vmatpush1.msra.mxu0 0.0
    %1416 = vmatprep.subr.mxu0 0.0
    %1417 = vmatpush1.msra.mxu0 0.0
    %1418 = vmatprep.subr.mxu0 0.0
    %1419 = vmatpush1.msra.mxu0 0.0
    %1420 = vmatprep.subr.mxu0 0.0
    %1421 = vmatpush1.msra.mxu0 0.0
    %1422 = vmatprep.subr.mxu0 0.0
    %1423 = vmatpush1.msra.mxu0 0.0
    %1424 = vmatprep.subr.mxu0 0.0
    %1425 = vmatpush1.msra.mxu0 0.0
    %1426 = vmatprep.subr.mxu0 0.0
    %1427 = vmatpush1.msra.mxu0 0.0
    %1428 = vmatprep.subr.mxu0 0.0
    %1429 = vmatpush1.msra.mxu0 0.0
    %1430 = vmatprep.subr.mxu0 0.0
    %1431 = vmatpush1.msra.mxu0 0.0
    %1432 = vmatprep.subr.mxu0 0.0
    %1433 = vmatpush1.msra.mxu0 0.0
    %1434 = vmatprep.subr.mxu0 0.0
    %1435 = vmatpush1.msra.mxu0 0.0
    %1436 = vmatprep.subr.mxu0 0.0
    %1437 = vmatpush1.msra.mxu0 0.0
    %1438 = vmatprep.subr.mxu0 0.0
    %1439 = vmatpush1.msra.mxu0 0.0
    %1440 = vmatprep.subr.mxu0 0.0
    %1441 = vmatpush1.msra.mxu0 0.0
    %1442 = vmatprep.mubr.f32.mxu0 0.0
    %1443 = vmatmul.mubr.f32.gmra.mrb[0].mxu0 %v689
    %v1444 = vpop.f32.mrb[0].mxu0
    %v1445 = vadd.f32 0.0, %v1444
    %v1446 = vpop.f32.mrb[0].mxu0
    %1447 = vmatprep.mubr.f32.mxu0 0.0
    %1448 = vmatmul.mubr.f32.gmra.mrb[0].mxu0 %v692
    %v1449 = vpop.f32.mrb[0].mxu0
    %v1450 = vadd.f32 0.0, %v1449
    %v1451 = vpop.f32.mrb[0].mxu0
    %1452 = vmatprep.mubr.f32.mxu0 0.0
    %1453 = vmatmul.mubr.f32.gmra.mrb[0].mxu0 %v695
    %v1454 = vpop.f32.mrb[0].mxu0
    %v1455 = vadd.f32 0.0, %v1454
    %v1456 = vpop.f32.mrb[0].mxu0
    %1457 = vdwg.mxu0
    %v1458 = vadd.f32 %v1363, %v1445
    %v1459 = vadd.f32 %v1364, %v1450
    %v1460 = vadd.f32 %v1365, %v1455
    %1461 = vmatprep.subr.mxu0 0.0
    %1462 = vmatpush1.msra.mxu0 %v1165
    %1463 = vmatprep.subr.mxu0 0.0
    %1464 = vmatpush1.msra.mxu0 %v1170
    %1465 = vmatprep.subr.mxu0 0.0
    %1466 = vmatpush1.msra.mxu0 %v1175
    %1467 = vmatprep.subr.mxu0 0.0
    %1468 = vmatpush1.msra.mxu0 0.0
    %1469 = vmatprep.subr.mxu0 0.0
    %1470 = vmatpush1.msra.mxu0 0.0
    %1471 = vmatprep.subr.mxu0 0.0
    %1472 = vmatpush1.msra.mxu0 0.0
    %1473 = vmatprep.subr.mxu0 0.0
    %1474 = vmatpush1.msra.mxu0 0.0
    %1475 = vmatprep.subr.mxu0 0.0
    %1476 = vmatpush1.msra.mxu0 0.0
    %1477 = vmatprep.subr.mxu0 0.0
    %1478 = vmatpush1.msra.mxu0 0.0
    %1479 = vmatprep.subr.mxu0 0.0
    %1480 = vmatpush1.msra.mxu0 0.0
    %1481 = vmatprep.subr.mxu0 0.0
    %1482 = vmatpush1.msra.mxu0 0.0
    %1483 = vmatprep.subr.mxu0 0.0
    %1484 = vmatpush1.msra.mxu0 0.0
    %1485 = vmatprep.subr.mxu0 0.0
    %1486 = vmatpush1.msra.mxu0 0.0
    %1487 = vmatprep.subr.mxu0 0.0
    %1488 = vmatpush1.msra.mxu0 0.0
    %1489 = vmatprep.subr.mxu0 0.0
    %1490 = vmatpush1.msra.mxu0 0.0
    %1491 = vmatprep.subr.mxu0 0.0
    %1492 = vmatpush1.msra.mxu0 0.0
    %1493 = vmatprep.subr.mxu0 0.0
    %1494 = vmatpush1.msra.mxu0 0.0
    %1495 = vmatprep.subr.mxu0 0.0
    %1496 = vmatpush1.msra.mxu0 0.0
    %1497 = vmatprep.subr.mxu0 0.0
    %1498 = vmatpush1.msra.mxu0 0.0
    %1499 = vmatprep.subr.mxu0 0.0
    %1500 = vmatpush1.msra.mxu0 0.0
    %1501 = vmatprep.subr.mxu0 0.0
    %1502 = vmatpush1.msra.mxu0 0.0
    %1503 = vmatprep.subr.mxu0 0.0
    %1504 = vmatpush1.msra.mxu0 0.0
    %1505 = vmatprep.subr.mxu0 0.0
    %1506 = vmatpush1.msra.mxu0 0.0
    %1507 = vmatprep.subr.mxu0 0.0
    %1508 = vmatpush1.msra.mxu0 0.0
    %1509 = vmatprep.subr.mxu0 0.0
    %1510 = vmatpush1.msra.mxu0 0.0
    %1511 = vmatprep.subr.mxu0 0.0
    %1512 = vmatpush1.msra.mxu0 0.0
    %1513 = vmatprep.subr.mxu0 0.0
    %1514 = vmatpush1.msra.mxu0 0.0
    %1515 = vmatprep.subr.mxu0 0.0
    %1516 = vmatpush1.msra.mxu0 0.0
    %1517 = vmatprep.subr.mxu0 0.0
    %1518 = vmatpush1.msra.mxu0 0.0
    %1519 = vmatprep.subr.mxu0 0.0
    %1520 = vmatpush1.msra.mxu0 0.0
    %1521 = vmatprep.subr.mxu0 0.0
    %1522 = vmatpush1.msra.mxu0 0.0
    %1523 = vmatprep.subr.mxu0 0.0
    %1524 = vmatpush1.msra.mxu0 0.0
    %1525 = vmatprep.mubr.f32.mxu0 0.0
    %1526 = vmatmul.mubr.f32.gmra.mrb[0].mxu0 %v781
    %v1527 = vpop.f32.mrb[0].mxu0
    %v1528 = vadd.f32 0.0, %v1527
    %v1529 = vpop.f32.mrb[0].mxu0
    %1530 = vmatprep.mubr.f32.mxu0 0.0
    %1531 = vmatmul.mubr.f32.gmra.mrb[0].mxu0 %v784
    %v1532 = vpop.f32.mrb[0].mxu0
    %v1533 = vadd.f32 0.0, %v1532
    %v1534 = vpop.f32.mrb[0].mxu0
    %1535 = vmatprep.mubr.f32.mxu0 0.0
    %1536 = vmatmul.mubr.f32.gmra.mrb[0].mxu0 %v787
    %v1537 = vpop.f32.mrb[0].mxu0
    %v1538 = vadd.f32 0.0, %v1537
    %v1539 = vpop.f32.mrb[0].mxu0
    %1540 = vdwg.mxu0
    %v1541 = vadd.f32 %v1458, %v1528
    %v1542 = vadd.f32 %v1459, %v1533
    %v1543 = vadd.f32 %v1460, %v1538
    %1547 = vrot.lane.b32.xlu0 %v1165, 64
    %v1548 = vpop.permute.xlu0 %1547
    %1549 = vrot.lane.b32.xlu0 %v1170, 64
    %v1550 = vpop.permute.xlu0 %1549
    %1551 = vrot.lane.b32.xlu0 %v1175, 64
    %v1552 = vpop.permute.xlu0 %1551
    %1556 = vmatprep.subr.mxu0 0.0
    %1557 = vmatpush1.msra.mxu0 %v1548
    %1558 = vmatprep.subr.mxu0 0.0
    %1559 = vmatpush1.msra.mxu0 %v1550
    %1560 = vmatprep.subr.mxu0 0.0
    %1561 = vmatpush1.msra.mxu0 %v1552
    %1562 = vmatprep.subr.mxu0 0.0
    %1563 = vmatpush1.msra.mxu0 0.0
    %1564 = vmatprep.subr.mxu0 0.0
    %1565 = vmatpush1.msra.mxu0 0.0
    %1566 = vmatprep.subr.mxu0 0.0
    %1567 = vmatpush1.msra.mxu0 0.0
    %1568 = vmatprep.subr.mxu0 0.0
    %1569 = vmatpush1.msra.mxu0 0.0
    %1570 = vmatprep.subr.mxu0 0.0
    %1571 = vmatpush1.msra.mxu0 0.0
    %1572 = vmatprep.subr.mxu0 0.0
    %1573 = vmatpush1.msra.mxu0 0.0
    %1574 = vmatprep.subr.mxu0 0.0
    %1575 = vmatpush1.msra.mxu0 0.0
    %1576 = vmatprep.subr.mxu0 0.0
    %1577 = vmatpush1.msra.mxu0 0.0
    %1578 = vmatprep.subr.mxu0 0.0
    %1579 = vmatpush1.msra.mxu0 0.0
    %1580 = vmatprep.subr.mxu0 0.0
    %1581 = vmatpush1.msra.mxu0 0.0
    %1582 = vmatprep.subr.mxu0 0.0
    %1583 = vmatpush1.msra.mxu0 0.0
    %1584 = vmatprep.subr.mxu0 0.0
    %1585 = vmatpush1.msra.mxu0 0.0
    %1586 = vmatprep.subr.mxu0 0.0
    %1587 = vmatpush1.msra.mxu0 0.0
    %1588 = vmatprep.subr.mxu0 0.0
    %1589 = vmatpush1.msra.mxu0 0.0
    %1590 = vmatprep.subr.mxu0 0.0
    %1591 = vmatpush1.msra.mxu0 0.0
    %1592 = vmatprep.subr.mxu0 0.0
    %1593 = vmatpush1.msra.mxu0 0.0
    %1594 = vmatprep.subr.mxu0 0.0
    %1595 = vmatpush1.msra.mxu0 0.0
    %1596 = vmatprep.subr.mxu0 0.0
    %1597 = vmatpush1.msra.mxu0 0.0
    %1598 = vmatprep.subr.mxu0 0.0
    %1599 = vmatpush1.msra.mxu0 0.0
    %1600 = vmatprep.subr.mxu0 0.0
    %1601 = vmatpush1.msra.mxu0 0.0
    %1602 = vmatprep.subr.mxu0 0.0
    %1603 = vmatpush1.msra.mxu0 0.0
    %1604 = vmatprep.subr.mxu0 0.0
    %1605 = vmatpush1.msra.mxu0 0.0
    %1606 = vmatprep.subr.mxu0 0.0
    %1607 = vmatpush1.msra.mxu0 0.0
    %1608 = vmatprep.subr.mxu0 0.0
    %1609 = vmatpush1.msra.mxu0 0.0
    %1610 = vmatprep.subr.mxu0 0.0
    %1611 = vmatpush1.msra.mxu0 0.0
    %1612 = vmatprep.subr.mxu0 0.0
    %1613 = vmatpush1.msra.mxu0 0.0
    %1614 = vmatprep.subr.mxu0 0.0
    %1615 = vmatpush1.msra.mxu0 0.0
    %1616 = vmatprep.subr.mxu0 0.0
    %1617 = vmatpush1.msra.mxu0 0.0
    %1618 = vmatprep.subr.mxu0 0.0
    %1619 = vmatpush1.msra.mxu0 0.0
    %1620 = vmatprep.mubr.f32.mxu0 0.0
    %1621 = vmatmul.mubr.f32.gmra.mrb[0].mxu0 %v873
    %v1622 = vpop.f32.mrb[0].mxu0
    %v1623 = vadd.f32 0.0, %v1622
    %v1624 = vpop.f32.mrb[0].mxu0
    %1625 = vmatprep.mubr.f32.mxu0 0.0
    %1626 = vmatmul.mubr.f32.gmra.mrb[0].mxu0 %v876
    %v1627 = vpop.f32.mrb[0].mxu0
    %v1628 = vadd.f32 0.0, %v1627
    %v1629 = vpop.f32.mrb[0].mxu0
    %1630 = vmatprep.mubr.f32.mxu0 0.0
    %1631 = vmatmul.mubr.f32.gmra.mrb[0].mxu0 %v879
    %v1632 = vpop.f32.mrb[0].mxu0
    %v1633 = vadd.f32 0.0, %v1632
    %v1634 = vpop.f32.mrb[0].mxu0
    %1635 = vdwg.mxu0
    %v1636 = vadd.f32 %v1541, %v1623
    %v1637 = vadd.f32 %v1542, %v1628
    %v1638 = vadd.f32 %v1543, %v1633
    %v1639 = vtanh.pop %v1636
    %v1640 = vtanh.pop %v1637
    %v1641 = vtanh.pop %v1638
    %v1642 = vld [vmem:[#allocation8] sm:$0xff]
    %v1643 = vld [vmem:[#allocation8 + $0x8] sm:$0xff]
    %v1644 = vld [vmem:[#allocation8 + $0x10] sm:$0xff]
    %v1645 = vld [vmem:[#allocation8 + $0x18] sm:$0xff]
    %v1646 = vld [vmem:[#allocation8 + $0x20] sm:$0xff]
    %v1647 = vld [vmem:[#allocation8 + $0x28] sm:$0xff]
    %v1648 = vld [vmem:[#allocation8 + $0x30] sm:$0xff]
    %v1649 = vld [vmem:[#allocation8 + $0x38] sm:$0xff]
    %v1650 = vld [vmem:[#allocation8 + $0x40] sm:$0xff]
    %v1651 = vld [vmem:[#allocation8 + $0x48] sm:$0xff]
    %v1652 = vld [vmem:[#allocation8 + $0x50] sm:$0xff]
    %v1653 = vld [vmem:[#allocation8 + $0x58] sm:$0xff]
    %v1654 = vld [vmem:[#allocation8 + $0x60] sm:$0xff]
    %v1655 = vld [vmem:[#allocation8 + $0x68] sm:$0xff]
    %v1656 = vld [vmem:[#allocation8 + $0x70] sm:$0xff]
    %v1657 = vld [vmem:[#allocation8 + $0x78] sm:$0xff]
    %v1658 = vld [vmem:[#allocation8 + $0x80] sm:$0xff]
    %v1659 = vld [vmem:[#allocation8 + $0x88] sm:$0xff]
    %v1660 = vld [vmem:[#allocation8 + $0x90] sm:$0xff]
    %v1661 = vld [vmem:[#allocation8 + $0x98] sm:$0xff]
    %v1662 = vld [vmem:[#allocation8 + $0xa0] sm:$0xff]
    %v1663 = vld [vmem:[#allocation8 + $0xa8] sm:$0xff]
    %v1664 = vld [vmem:[#allocation8 + $0xb0] sm:$0xff]
    %v1665 = vld [vmem:[#allocation8 + $0xb8] sm:$0xff]
    %vm1666 = vcmask 523264
    %v1668 = vsel %vm1666, %v1639, 0
    %v1671 = vsel %vm1666, %v1640, 0
    %v1674 = vsel %vm1666, %v1641, 0
    %1676 = vmatprep.subr.mxu0 %v1643
    %1677 = vmatpush1.msra.mxu0 %v1642
    %1678 = vmatprep.subr.mxu0 %v1646
    %1679 = vmatpush1.msra.mxu0 %v1645
    %1680 = vmatprep.subr.mxu0 %v1649
    %1681 = vmatpush1.msra.mxu0 %v1648
    %1682 = vmatprep.subr.mxu0 %v1652
    %1683 = vmatpush1.msra.mxu0 %v1651
    %1684 = vmatprep.subr.mxu0 %v1655
    %1685 = vmatpush1.msra.mxu0 %v1654
    %1686 = vmatprep.subr.mxu0 %v1658
    %1687 = vmatpush1.msra.mxu0 %v1657
    %1688 = vmatprep.subr.mxu0 %v1661
    %1689 = vmatpush1.msra.mxu0 %v1660
    %1690 = vmatprep.subr.mxu0 %v1664
    %1691 = vmatpush1.msra.mxu0 %v1663
    %1692 = vmatprep.subr.mxu0 0.0
    %1693 = vmatpush1.msra.mxu0 0.0
    %1694 = vmatprep.subr.mxu0 0.0
    %1695 = vmatpush1.msra.mxu0 0.0
    %1696 = vmatprep.subr.mxu0 0.0
    %1697 = vmatpush1.msra.mxu0 0.0
    %1698 = vmatprep.subr.mxu0 0.0
    %1699 = vmatpush1.msra.mxu0 0.0
    %1700 = vmatprep.subr.mxu0 0.0
    %1701 = vmatpush1.msra.mxu0 0.0
    %1702 = vmatprep.subr.mxu0 0.0
    %1703 = vmatpush1.msra.mxu0 0.0
    %1704 = vmatprep.subr.mxu0 0.0
    %1705 = vmatpush1.msra.mxu0 0.0
    %1706 = vmatprep.subr.mxu0 0.0
    %1707 = vmatpush1.msra.mxu0 0.0
    %1708 = vmatprep.subr.mxu0 0.0
    %1709 = vmatpush1.msra.mxu0 0.0
    %1710 = vmatprep.subr.mxu0 0.0
    %1711 = vmatpush1.msra.mxu0 0.0
    %1712 = vmatprep.subr.mxu0 0.0
    %1713 = vmatpush1.msra.mxu0 0.0
    %1714 = vmatprep.subr.mxu0 0.0
    %1715 = vmatpush1.msra.mxu0 0.0
    %1716 = vmatprep.subr.mxu0 0.0
    %1717 = vmatpush1.msra.mxu0 0.0
    %1718 = vmatprep.subr.mxu0 0.0
    %1719 = vmatpush1.msra.mxu0 0.0
    %1720 = vmatprep.subr.mxu0 0.0
    %1721 = vmatpush1.msra.mxu0 0.0
    %1722 = vmatprep.subr.mxu0 0.0
    %1723 = vmatpush1.msra.mxu0 0.0
    %1724 = vmatprep.subr.mxu0 0.0
    %1725 = vmatpush1.msra.mxu0 0.0
    %1726 = vmatprep.subr.mxu0 0.0
    %1727 = vmatpush1.msra.mxu0 0.0
    %1728 = vmatprep.subr.mxu0 0.0
    %1729 = vmatpush1.msra.mxu0 0.0
    %1730 = vmatprep.subr.mxu0 0.0
    %1731 = vmatpush1.msra.mxu0 0.0
    %1732 = vmatprep.subr.mxu0 0.0
    %1733 = vmatpush1.msra.mxu0 0.0
    %1734 = vmatprep.subr.mxu0 0.0
    %1735 = vmatpush1.msra.mxu0 0.0
    %1736 = vmatprep.subr.mxu0 0.0
    %1737 = vmatpush1.msra.mxu0 0.0
    %1738 = vmatprep.subr.mxu0 0.0
    %1739 = vmatpush1.msra.mxu0 0.0
    %1740 = vmatprep.mubr.f32.mxu0 0.0
    %1741 = vmatmul.mubr.f32.gmra.mrb[0].mxu0 %v1668
    %v1742 = vpop.f32.mrb[0].mxu0
    %v1743 = vadd.f32 0.0, %v1742
    %v1744 = vpop.f32.mrb[0].mxu0
    %v1745 = vadd.f32 0.0, %v1744
    %1746 = vmatprep.mubr.f32.mxu0 0.0
    %1747 = vmatmul.mubr.f32.gmra.mrb[0].mxu0 %v1671
    %v1748 = vpop.f32.mrb[0].mxu0
    %v1749 = vadd.f32 0.0, %v1748
    %v1750 = vpop.f32.mrb[0].mxu0
    %v1751 = vadd.f32 0.0, %v1750
    %1752 = vmatprep.mubr.f32.mxu0 0.0
    %1753 = vmatmul.mubr.f32.gmra.mrb[0].mxu0 %v1674
    %v1754 = vpop.f32.mrb[0].mxu0
    %v1755 = vadd.f32 0.0, %v1754
    %v1756 = vpop.f32.mrb[0].mxu0
    %v1757 = vadd.f32 0.0, %v1756
    %1758 = vdwg.mxu0
    %1759 = vmatprep.subr.mxu0 0.0
    %1760 = vmatpush1.msra.mxu0 %v1644
    %1761 = vmatprep.subr.mxu0 0.0
    %1762 = vmatpush1.msra.mxu0 %v1647
    %1763 = vmatprep.subr.mxu0 0.0
    %1764 = vmatpush1.msra.mxu0 %v1650
    %1765 = vmatprep.subr.mxu0 0.0
    %1766 = vmatpush1.msra.mxu0 %v1653
    %1767 = vmatprep.subr.mxu0 0.0
    %1768 = vmatpush1.msra.mxu0 %v1656
    %1769 = vmatprep.subr.mxu0 0.0
    %1770 = vmatpush1.msra.mxu0 %v1659
    %1771 = vmatprep.subr.mxu0 0.0
    %1772 = vmatpush1.msra.mxu0 %v1662
    %1773 = vmatprep.subr.mxu0 0.0
    %1774 = vmatpush1.msra.mxu0 %v1665
    %1775 = vmatprep.subr.mxu0 0.0
    %1776 = vmatpush1.msra.mxu0 0.0
    %1777 = vmatprep.subr.mxu0 0.0
    %1778 = vmatpush1.msra.mxu0 0.0
    %1779 = vmatprep.subr.mxu0 0.0
    %1780 = vmatpush1.msra.mxu0 0.0
    %1781 = vmatprep.subr.mxu0 0.0
    %1782 = vmatpush1.msra.mxu0 0.0
    %1783 = vmatprep.subr.mxu0 0.0
    %1784 = vmatpush1.msra.mxu0 0.0
    %1785 = vmatprep.subr.mxu0 0.0
    %1786 = vmatpush1.msra.mxu0 0.0
    %1787 = vmatprep.subr.mxu0 0.0
    %1788 = vmatpush1.msra.mxu0 0.0
    %1789 = vmatprep.subr.mxu0 0.0
    %1790 = vmatpush1.msra.mxu0 0.0
    %1791 = vmatprep.subr.mxu0 0.0
    %1792 = vmatpush1.msra.mxu0 0.0
    %1793 = vmatprep.subr.mxu0 0.0
    %1794 = vmatpush1.msra.mxu0 0.0
    %1795 = vmatprep.subr.mxu0 0.0
    %1796 = vmatpush1.msra.mxu0 0.0
    %1797 = vmatprep.subr.mxu0 0.0
    %1798 = vmatpush1.msra.mxu0 0.0
    %1799 = vmatprep.subr.mxu0 0.0
    %1800 = vmatpush1.msra.mxu0 0.0
    %1801 = vmatprep.subr.mxu0 0.0
    %1802 = vmatpush1.msra.mxu0 0.0
    %1803 = vmatprep.subr.mxu0 0.0
    %1804 = vmatpush1.msra.mxu0 0.0
    %1805 = vmatprep.subr.mxu0 0.0
    %1806 = vmatpush1.msra.mxu0 0.0
    %1807 = vmatprep.subr.mxu0 0.0
    %1808 = vmatpush1.msra.mxu0 0.0
    %1809 = vmatprep.subr.mxu0 0.0
    %1810 = vmatpush1.msra.mxu0 0.0
    %1811 = vmatprep.subr.mxu0 0.0
    %1812 = vmatpush1.msra.mxu0 0.0
    %1813 = vmatprep.subr.mxu0 0.0
    %1814 = vmatpush1.msra.mxu0 0.0
    %1815 = vmatprep.subr.mxu0 0.0
    %1816 = vmatpush1.msra.mxu0 0.0
    %1817 = vmatprep.subr.mxu0 0.0
    %1818 = vmatpush1.msra.mxu0 0.0
    %1819 = vmatprep.subr.mxu0 0.0
    %1820 = vmatpush1.msra.mxu0 0.0
    %1821 = vmatprep.subr.mxu0 0.0
    %1822 = vmatpush1.msra.mxu0 0.0
    %1823 = vmatprep.mubr.f32.mxu0 0.0
    %1824 = vmatmul.mubr.f32.gmra.mrb[0].mxu0 %v1668
    %v1825 = vpop.f32.mrb[0].mxu0
    %v1826 = vadd.f32 0.0, %v1825
    %v1827 = vpop.f32.mrb[0].mxu0
    %1828 = vmatprep.mubr.f32.mxu0 0.0
    %1829 = vmatmul.mubr.f32.gmra.mrb[0].mxu0 %v1671
    %v1830 = vpop.f32.mrb[0].mxu0
    %v1831 = vadd.f32 0.0, %v1830
    %v1832 = vpop.f32.mrb[0].mxu0
    %1833 = vmatprep.mubr.f32.mxu0 0.0
    %1834 = vmatmul.mubr.f32.gmra.mrb[0].mxu0 %v1674
    %v1835 = vpop.f32.mrb[0].mxu0
    %v1836 = vadd.f32 0.0, %v1835
    %v1837 = vpop.f32.mrb[0].mxu0
    %1838 = vdwg.mxu0
    %v1839 = vld [vmem:[%s8] sm:$0x1]
    %v1841 = vlaneseq
    %v1842 = vshrl.u32 %v1841, 7
    %v1843 = vsub.s32 0, %v1842
    %v1844 = vrot.slane %v1839, %v1843
    %v1846 = vadd.f32 %v1743, %v1844
    %v1847 = vadd.f32 %v1749, %v1844
    %v1848 = vadd.f32 %v1755, %v1844
    %1852 = vrot.lane.b32.xlu0 %v1743, 64
    %v1853 = vpop.permute.xlu0 %1852
    %1854 = vrot.lane.b32.xlu0 %v1749, 64
    %v1855 = vpop.permute.xlu0 %1854
    %1856 = vrot.lane.b32.xlu0 %v1755, 64
    %v1857 = vpop.permute.xlu0 %1856
    %1861 = vmatprep.subr.mxu0 0.0
    %1862 = vmatpush1.msra.mxu0 %v1853
    %1863 = vmatprep.subr.mxu0 0.0
    %1864 = vmatpush1.msra.mxu0 %v1855
    %1865 = vmatprep.subr.mxu0 0.0
    %1866 = vmatpush1.msra.mxu0 %v1857
    %1867 = vmatprep.subr.mxu0 0.0
    %1868 = vmatpush1.msra.mxu0 0.0
    %1869 = vmatprep.subr.mxu0 0.0
    %1870 = vmatpush1.msra.mxu0 0.0
    %1871 = vmatprep.subr.mxu0 0.0
    %1872 = vmatpush1.msra.mxu0 0.0
    %1873 = vmatprep.subr.mxu0 0.0
    %1874 = vmatpush1.msra.mxu0 0.0
    %1875 = vmatprep.subr.mxu0 0.0
    %1876 = vmatpush1.msra.mxu0 0.0
    %1877 = vmatprep.subr.mxu0 0.0
    %1878 = vmatpush1.msra.mxu0 0.0
    %1879 = vmatprep.subr.mxu0 0.0
    %1880 = vmatpush1.msra.mxu0 0.0
    %1881 = vmatprep.subr.mxu0 0.0
    %1882 = vmatpush1.msra.mxu0 0.0
    %1883 = vmatprep.subr.mxu0 0.0
    %1884 = vmatpush1.msra.mxu0 0.0
    %1885 = vmatprep.subr.mxu0 0.0
    %1886 = vmatpush1.msra.mxu0 0.0
    %1887 = vmatprep.subr.mxu0 0.0
    %1888 = vmatpush1.msra.mxu0 0.0
    %1889 = vmatprep.subr.mxu0 0.0
    %1890 = vmatpush1.msra.mxu0 0.0
    %1891 = vmatprep.subr.mxu0 0.0
    %1892 = vmatpush1.msra.mxu0 0.0
    %1893 = vmatprep.subr.mxu0 0.0
    %1894 = vmatpush1.msra.mxu0 0.0
    %1895 = vmatprep.subr.mxu0 0.0
    %1896 = vmatpush1.msra.mxu0 0.0
    %1897 = vmatprep.subr.mxu0 0.0
    %1898 = vmatpush1.msra.mxu0 0.0
    %1899 = vmatprep.subr.mxu0 0.0
    %1900 = vmatpush1.msra.mxu0 0.0
    %1901 = vmatprep.subr.mxu0 0.0
    %1902 = vmatpush1.msra.mxu0 0.0
    %1903 = vmatprep.subr.mxu0 0.0
    %1904 = vmatpush1.msra.mxu0 0.0
    %1905 = vmatprep.subr.mxu0 0.0
    %1906 = vmatpush1.msra.mxu0 0.0
    %1907 = vmatprep.subr.mxu0 0.0
    %1908 = vmatpush1.msra.mxu0 0.0
    %1909 = vmatprep.subr.mxu0 0.0
    %1910 = vmatpush1.msra.mxu0 0.0
    %1911 = vmatprep.subr.mxu0 0.0
    %1912 = vmatpush1.msra.mxu0 0.0
    %1913 = vmatprep.subr.mxu0 0.0
    %1914 = vmatpush1.msra.mxu0 0.0
    %1915 = vmatprep.subr.mxu0 0.0
    %1916 = vmatpush1.msra.mxu0 0.0
    %1917 = vmatprep.subr.mxu0 0.0
    %1918 = vmatpush1.msra.mxu0 0.0
    %1919 = vmatprep.subr.mxu0 0.0
    %1920 = vmatpush1.msra.mxu0 0.0
    %1921 = vmatprep.subr.mxu0 0.0
    %1922 = vmatpush1.msra.mxu0 0.0
    %1923 = vmatprep.subr.mxu0 0.0
    %1924 = vmatpush1.msra.mxu0 0.0
    %1925 = vmatprep.mubr.f32.mxu0 0.0
    %1926 = vmatmul.mubr.f32.gmra.mrb[0].mxu0 %v505
    %v1927 = vpop.f32.mrb[0].mxu0
    %v1928 = vadd.f32 0.0, %v1927
    %v1929 = vpop.f32.mrb[0].mxu0
    %1930 = vmatprep.mubr.f32.mxu0 0.0
    %1931 = vmatmul.mubr.f32.gmra.mrb[0].mxu0 %v508
    %v1932 = vpop.f32.mrb[0].mxu0
    %v1933 = vadd.f32 0.0, %v1932
    %v1934 = vpop.f32.mrb[0].mxu0
    %1935 = vmatprep.mubr.f32.mxu0 0.0
    %1936 = vmatmul.mubr.f32.gmra.mrb[0].mxu0 %v511
    %v1937 = vpop.f32.mrb[0].mxu0
    %v1938 = vadd.f32 0.0, %v1937
    %v1939 = vpop.f32.mrb[0].mxu0
    %1940 = vdwg.mxu0
    %v1941 = vadd.f32 %v1846, %v1928
    %v1942 = vadd.f32 %v1847, %v1933
    %v1943 = vadd.f32 %v1848, %v1938
    %1944 = vmatprep.subr.mxu0 0.0
    %1945 = vmatpush1.msra.mxu0 %v1745
    %1946 = vmatprep.subr.mxu0 0.0
    %1947 = vmatpush1.msra.mxu0 %v1751
    %1948 = vmatprep.subr.mxu0 0.0
    %1949 = vmatpush1.msra.mxu0 %v1757
    %1950 = vmatprep.subr.mxu0 0.0
    %1951 = vmatpush1.msra.mxu0 0.0
    %1952 = vmatprep.subr.mxu0 0.0
    %1953 = vmatpush1.msra.mxu0 0.0
    %1954 = vmatprep.subr.mxu0 0.0
    %1955 = vmatpush1.msra.mxu0 0.0
    %1956 = vmatprep.subr.mxu0 0.0
    %1957 = vmatpush1.msra.mxu0 0.0
    %1958 = vmatprep.subr.mxu0 0.0
    %1959 = vmatpush1.msra.mxu0 0.0
    %1960 = vmatprep.subr.mxu0 0.0
    %1961 = vmatpush1.msra.mxu0 0.0
    %1962 = vmatprep.subr.mxu0 0.0
    %1963 = vmatpush1.msra.mxu0 0.0
    %1964 = vmatprep.subr.mxu0 0.0
    %1965 = vmatpush1.msra.mxu0 0.0
    %1966 = vmatprep.subr.mxu0 0.0
    %1967 = vmatpush1.msra.mxu0 0.0
    %1968 = vmatprep.subr.mxu0 0.0
    %1969 = vmatpush1.msra.mxu0 0.0
    %1970 = vmatprep.subr.mxu0 0.0
    %1971 = vmatpush1.msra.mxu0 0.0
    %1972 = vmatprep.subr.mxu0 0.0
    %1973 = vmatpush1.msra.mxu0 0.0
    %1974 = vmatprep.subr.mxu0 0.0
    %1975 = vmatpush1.msra.mxu0 0.0
    %1976 = vmatprep.subr.mxu0 0.0
    %1977 = vmatpush1.msra.mxu0 0.0
    %1978 = vmatprep.subr.mxu0 0.0
    %1979 = vmatpush1.msra.mxu0 0.0
    %1980 = vmatprep.subr.mxu0 0.0
    %1981 = vmatpush1.msra.mxu0 0.0
    %1982 = vmatprep.subr.mxu0 0.0
    %1983 = vmatpush1.msra.mxu0 0.0
    %1984 = vmatprep.subr.mxu0 0.0
    %1985 = vmatpush1.msra.mxu0 0.0
    %1986 = vmatprep.subr.mxu0 0.0
    %1987 = vmatpush1.msra.mxu0 0.0
    %1988 = vmatprep.subr.mxu0 0.0
    %1989 = vmatpush1.msra.mxu0 0.0
    %1990 = vmatprep.subr.mxu0 0.0
    %1991 = vmatpush1.msra.mxu0 0.0
    %1992 = vmatprep.subr.mxu0 0.0
    %1993 = vmatpush1.msra.mxu0 0.0
    %1994 = vmatprep.subr.mxu0 0.0
    %1995 = vmatpush1.msra.mxu0 0.0
    %1996 = vmatprep.subr.mxu0 0.0
    %1997 = vmatpush1.msra.mxu0 0.0
    %1998 = vmatprep.subr.mxu0 0.0
    %1999 = vmatpush1.msra.mxu0 0.0
    %2000 = vmatprep.subr.mxu0 0.0
    %2001 = vmatpush1.msra.mxu0 0.0
    %2002 = vmatprep.subr.mxu0 0.0
    %2003 = vmatpush1.msra.mxu0 0.0
    %2004 = vmatprep.subr.mxu0 0.0
    %2005 = vmatpush1.msra.mxu0 0.0
    %2006 = vmatprep.subr.mxu0 0.0
    %2007 = vmatpush1.msra.mxu0 0.0
    %2008 = vmatprep.mubr.f32.mxu0 0.0
    %2009 = vmatmul.mubr.f32.gmra.mrb[0].mxu0 %v597
    %v2010 = vpop.f32.mrb[0].mxu0
    %v2011 = vadd.f32 0.0, %v2010
    %v2012 = vpop.f32.mrb[0].mxu0
    %2013 = vmatprep.mubr.f32.mxu0 0.0
    %2014 = vmatmul.mubr.f32.gmra.mrb[0].mxu0 %v600
    %v2015 = vpop.f32.mrb[0].mxu0
    %v2016 = vadd.f32 0.0, %v2015
    %v2017 = vpop.f32.mrb[0].mxu0
    %2018 = vmatprep.mubr.f32.mxu0 0.0
    %2019 = vmatmul.mubr.f32.gmra.mrb[0].mxu0 %v603
    %v2020 = vpop.f32.mrb[0].mxu0
    %v2021 = vadd.f32 0.0, %v2020
    %v2022 = vpop.f32.mrb[0].mxu0
    %2023 = vdwg.mxu0
    %v2024 = vadd.f32 %v1941, %v2011
    %v2025 = vadd.f32 %v1942, %v2016
    %v2026 = vadd.f32 %v1943, %v2021
    %2030 = vrot.lane.b32.xlu0 %v1745, 64
    %v2031 = vpop.permute.xlu0 %2030
    %2032 = vrot.lane.b32.xlu0 %v1751, 64
    %v2033 = vpop.permute.xlu0 %2032
    %2034 = vrot.lane.b32.xlu0 %v1757, 64
    %v2035 = vpop.permute.xlu0 %2034
    %2039 = vmatprep.subr.mxu0 0.0
    %2040 = vmatpush1.msra.mxu0 %v2031
    %2041 = vmatprep.subr.mxu0 0.0
    %2042 = vmatpush1.msra.mxu0 %v2033
    %2043 = vmatprep.subr.mxu0 0.0
    %2044 = vmatpush1.msra.mxu0 %v2035
    %2045 = vmatprep.subr.mxu0 0.0
    %2046 = vmatpush1.msra.mxu0 0.0
    %2047 = vmatprep.subr.mxu0 0.0
    %2048 = vmatpush1.msra.mxu0 0.0
    %2049 = vmatprep.subr.mxu0 0.0
    %2050 = vmatpush1.msra.mxu0 0.0
    %2051 = vmatprep.subr.mxu0 0.0
    %2052 = vmatpush1.msra.mxu0 0.0
    %2053 = vmatprep.subr.mxu0 0.0
    %2054 = vmatpush1.msra.mxu0 0.0
    %2055 = vmatprep.subr.mxu0 0.0
    %2056 = vmatpush1.msra.mxu0 0.0
    %2057 = vmatprep.subr.mxu0 0.0
    %2058 = vmatpush1.msra.mxu0 0.0
    %2059 = vmatprep.subr.mxu0 0.0
    %2060 = vmatpush1.msra.mxu0 0.0
    %2061 = vmatprep.subr.mxu0 0.0
    %2062 = vmatpush1.msra.mxu0 0.0
    %2063 = vmatprep.subr.mxu0 0.0
    %2064 = vmatpush1.msra.mxu0 0.0
    %2065 = vmatprep.subr.mxu0 0.0
    %2066 = vmatpush1.msra.mxu0 0.0
    %2067 = vmatprep.subr.mxu0 0.0
    %2068 = vmatpush1.msra.mxu0 0.0
    %2069 = vmatprep.subr.mxu0 0.0
    %2070 = vmatpush1.msra.mxu0 0.0
    %2071 = vmatprep.subr.mxu0 0.0
    %2072 = vmatpush1.msra.mxu0 0.0
    %2073 = vmatprep.subr.mxu0 0.0
    %2074 = vmatpush1.msra.mxu0 0.0
    %2075 = vmatprep.subr.mxu0 0.0
    %2076 = vmatpush1.msra.mxu0 0.0
    %2077 = vmatprep.subr.mxu0 0.0
    %2078 = vmatpush1.msra.mxu0 0.0
    %2079 = vmatprep.subr.mxu0 0.0
    %2080 = vmatpush1.msra.mxu0 0.0
    %2081 = vmatprep.subr.mxu0 0.0
    %2082 = vmatpush1.msra.mxu0 0.0
    %2083 = vmatprep.subr.mxu0 0.0
    %2084 = vmatpush1.msra.mxu0 0.0
    %2085 = vmatprep.subr.mxu0 0.0
    %2086 = vmatpush1.msra.mxu0 0.0
    %2087 = vmatprep.subr.mxu0 0.0
    %2088 = vmatpush1.msra.mxu0 0.0
    %2089 = vmatprep.subr.mxu0 0.0
    %2090 = vmatpush1.msra.mxu0 0.0
    %2091 = vmatprep.subr.mxu0 0.0
    %2092 = vmatpush1.msra.mxu0 0.0
    %2093 = vmatprep.subr.mxu0 0.0
    %2094 = vmatpush1.msra.mxu0 0.0
    %2095 = vmatprep.subr.mxu0 0.0
    %2096 = vmatpush1.msra.mxu0 0.0
    %2097 = vmatprep.subr.mxu0 0.0
    %2098 = vmatpush1.msra.mxu0 0.0
    %2099 = vmatprep.subr.mxu0 0.0
    %2100 = vmatpush1.msra.mxu0 0.0
    %2101 = vmatprep.subr.mxu0 0.0
    %2102 = vmatpush1.msra.mxu0 0.0
    %2103 = vmatprep.mubr.f32.mxu0 0.0
    %2104 = vmatmul.mubr.f32.gmra.mrb[0].mxu0 %v689
    %v2105 = vpop.f32.mrb[0].mxu0
    %v2106 = vadd.f32 0.0, %v2105
    %v2107 = vpop.f32.mrb[0].mxu0
    %2108 = vmatprep.mubr.f32.mxu0 0.0
    %2109 = vmatmul.mubr.f32.gmra.mrb[0].mxu0 %v692
    %v2110 = vpop.f32.mrb[0].mxu0
    %v2111 = vadd.f32 0.0, %v2110
    %v2112 = vpop.f32.mrb[0].mxu0
    %2113 = vmatprep.mubr.f32.mxu0 0.0
    %2114 = vmatmul.mubr.f32.gmra.mrb[0].mxu0 %v695
    %v2115 = vpop.f32.mrb[0].mxu0
    %v2116 = vadd.f32 0.0, %v2115
    %v2117 = vpop.f32.mrb[0].mxu0
    %2118 = vdwg.mxu0
    %v2119 = vadd.f32 %v2024, %v2106
    %v2120 = vadd.f32 %v2025, %v2111
    %v2121 = vadd.f32 %v2026, %v2116
    %2122 = vmatprep.subr.mxu0 0.0
    %2123 = vmatpush1.msra.mxu0 %v1826
    %2124 = vmatprep.subr.mxu0 0.0
    %2125 = vmatpush1.msra.mxu0 %v1831
    %2126 = vmatprep.subr.mxu0 0.0
    %2127 = vmatpush1.msra.mxu0 %v1836
    %2128 = vmatprep.subr.mxu0 0.0
    %2129 = vmatpush1.msra.mxu0 0.0
    %2130 = vmatprep.subr.mxu0 0.0
    %2131 = vmatpush1.msra.mxu0 0.0
    %2132 = vmatprep.subr.mxu0 0.0
    %2133 = vmatpush1.msra.mxu0 0.0
    %2134 = vmatprep.subr.mxu0 0.0
    %2135 = vmatpush1.msra.mxu0 0.0
    %2136 = vmatprep.subr.mxu0 0.0
    %2137 = vmatpush1.msra.mxu0 0.0
    %2138 = vmatprep.subr.mxu0 0.0
    %2139 = vmatpush1.msra.mxu0 0.0
    %2140 = vmatprep.subr.mxu0 0.0
    %2141 = vmatpush1.msra.mxu0 0.0
    %2142 = vmatprep.subr.mxu0 0.0
    %2143 = vmatpush1.msra.mxu0 0.0
    %2144 = vmatprep.subr.mxu0 0.0
    %2145 = vmatpush1.msra.mxu0 0.0
    %2146 = vmatprep.subr.mxu0 0.0
    %2147 = vmatpush1.msra.mxu0 0.0
    %2148 = vmatprep.subr.mxu0 0.0
    %2149 = vmatpush1.msra.mxu0 0.0
    %2150 = vmatprep.subr.mxu0 0.0
    %2151 = vmatpush1.msra.mxu0 0.0
    %2152 = vmatprep.subr.mxu0 0.0
    %2153 = vmatpush1.msra.mxu0 0.0
    %2154 = vmatprep.subr.mxu0 0.0
    %2155 = vmatpush1.msra.mxu0 0.0
    %2156 = vmatprep.subr.mxu0 0.0
    %2157 = vmatpush1.msra.mxu0 0.0
    %2158 = vmatprep.subr.mxu0 0.0
    %2159 = vmatpush1.msra.mxu0 0.0
    %2160 = vmatprep.subr.mxu0 0.0
    %2161 = vmatpush1.msra.mxu0 0.0
    %2162 = vmatprep.subr.mxu0 0.0
    %2163 = vmatpush1.msra.mxu0 0.0
    %2164 = vmatprep.subr.mxu0 0.0
    %2165 = vmatpush1.msra.mxu0 0.0
    %2166 = vmatprep.subr.mxu0 0.0
    %2167 = vmatpush1.msra.mxu0 0.0
    %2168 = vmatprep.subr.mxu0 0.0
    %2169 = vmatpush1.msra.mxu0 0.0
    %2170 = vmatprep.subr.mxu0 0.0
    %2171 = vmatpush1.msra.mxu0 0.0
    %2172 = vmatprep.subr.mxu0 0.0
    %2173 = vmatpush1.msra.mxu0 0.0
    %2174 = vmatprep.subr.mxu0 0.0
    %2175 = vmatpush1.msra.mxu0 0.0
    %2176 = vmatprep.subr.mxu0 0.0
    %2177 = vmatpush1.msra.mxu0 0.0
    %2178 = vmatprep.subr.mxu0 0.0
    %2179 = vmatpush1.msra.mxu0 0.0
    %2180 = vmatprep.subr.mxu0 0.0
    %2181 = vmatpush1.msra.mxu0 0.0
    %2182 = vmatprep.subr.mxu0 0.0
    %2183 = vmatpush1.msra.mxu0 0.0
    %2184 = vmatprep.subr.mxu0 0.0
    %2185 = vmatpush1.msra.mxu0 0.0
    %2186 = vmatprep.mubr.f32.mxu0 0.0
    %2187 = vmatmul.mubr.f32.gmra.mrb[0].mxu0 %v781
    %v2188 = vpop.f32.mrb[0].mxu0
    %v2189 = vadd.f32 0.0, %v2188
    %v2190 = vpop.f32.mrb[0].mxu0
    %2191 = vmatprep.mubr.f32.mxu0 0.0
    %2192 = vmatmul.mubr.f32.gmra.mrb[0].mxu0 %v784
    %v2193 = vpop.f32.mrb[0].mxu0
    %v2194 = vadd.f32 0.0, %v2193
    %v2195 = vpop.f32.mrb[0].mxu0
    %2196 = vmatprep.mubr.f32.mxu0 0.0
    %2197 = vmatmul.mubr.f32.gmra.mrb[0].mxu0 %v787
    %v2198 = vpop.f32.mrb[0].mxu0
    %v2199 = vadd.f32 0.0, %v2198
    %v2200 = vpop.f32.mrb[0].mxu0
    %2201 = vdwg.mxu0
    %v2202 = vadd.f32 %v2119, %v2189
    %v2203 = vadd.f32 %v2120, %v2194
    %v2204 = vadd.f32 %v2121, %v2199
    %2208 = vrot.lane.b32.xlu0 %v1826, 64
    %v2209 = vpop.permute.xlu0 %2208
    %2210 = vrot.lane.b32.xlu0 %v1831, 64
    %v2211 = vpop.permute.xlu0 %2210
    %2212 = vrot.lane.b32.xlu0 %v1836, 64
    %v2213 = vpop.permute.xlu0 %2212
    %2217 = vmatprep.subr.mxu0 0.0
    %2218 = vmatpush1.msra.mxu0 %v2209
    %2219 = vmatprep.subr.mxu0 0.0
    %2220 = vmatpush1.msra.mxu0 %v2211
    %2221 = vmatprep.subr.mxu0 0.0
    %2222 = vmatpush1.msra.mxu0 %v2213
    %2223 = vmatprep.subr.mxu0 0.0
    %2224 = vmatpush1.msra.mxu0 0.0
    %2225 = vmatprep.subr.mxu0 0.0
    %2226 = vmatpush1.msra.mxu0 0.0
    %2227 = vmatprep.subr.mxu0 0.0
    %2228 = vmatpush1.msra.mxu0 0.0
    %2229 = vmatprep.subr.mxu0 0.0
    %2230 = vmatpush1.msra.mxu0 0.0
    %2231 = vmatprep.subr.mxu0 0.0
    %2232 = vmatpush1.msra.mxu0 0.0
    %2233 = vmatprep.subr.mxu0 0.0
    %2234 = vmatpush1.msra.mxu0 0.0
    %2235 = vmatprep.subr.mxu0 0.0
    %2236 = vmatpush1.msra.mxu0 0.0
    %2237 = vmatprep.subr.mxu0 0.0
    %2238 = vmatpush1.msra.mxu0 0.0
    %2239 = vmatprep.subr.mxu0 0.0
    %2240 = vmatpush1.msra.mxu0 0.0
    %2241 = vmatprep.subr.mxu0 0.0
    %2242 = vmatpush1.msra.mxu0 0.0
    %2243 = vmatprep.subr.mxu0 0.0
    %2244 = vmatpush1.msra.mxu0 0.0
    %2245 = vmatprep.subr.mxu0 0.0
    %2246 = vmatpush1.msra.mxu0 0.0
    %2247 = vmatprep.subr.mxu0 0.0
    %2248 = vmatpush1.msra.mxu0 0.0
    %2249 = vmatprep.subr.mxu0 0.0
    %2250 = vmatpush1.msra.mxu0 0.0
    %2251 = vmatprep.subr.mxu0 0.0
    %2252 = vmatpush1.msra.mxu0 0.0
    %2253 = vmatprep.subr.mxu0 0.0
    %2254 = vmatpush1.msra.mxu0 0.0
    %2255 = vmatprep.subr.mxu0 0.0
    %2256 = vmatpush1.msra.mxu0 0.0
    %2257 = vmatprep.subr.mxu0 0.0
    %2258 = vmatpush1.msra.mxu0 0.0
    %2259 = vmatprep.subr.mxu0 0.0
    %2260 = vmatpush1.msra.mxu0 0.0
    %2261 = vmatprep.subr.mxu0 0.0
    %2262 = vmatpush1.msra.mxu0 0.0
    %2263 = vmatprep.subr.mxu0 0.0
    %2264 = vmatpush1.msra.mxu0 0.0
    %2265 = vmatprep.subr.mxu0 0.0
    %2266 = vmatpush1.msra.mxu0 0.0
    %2267 = vmatprep.subr.mxu0 0.0
    %2268 = vmatpush1.msra.mxu0 0.0
    %2269 = vmatprep.subr.mxu0 0.0
    %2270 = vmatpush1.msra.mxu0 0.0
    %2271 = vmatprep.subr.mxu0 0.0
    %2272 = vmatpush1.msra.mxu0 0.0
    %2273 = vmatprep.subr.mxu0 0.0
    %2274 = vmatpush1.msra.mxu0 0.0
    %2275 = vmatprep.subr.mxu0 0.0
    %2276 = vmatpush1.msra.mxu0 0.0
    %2277 = vmatprep.subr.mxu0 0.0
    %2278 = vmatpush1.msra.mxu0 0.0
    %2279 = vmatprep.subr.mxu0 0.0
    %2280 = vmatpush1.msra.mxu0 0.0
    %2281 = vmatprep.mubr.f32.mxu0 0.0
    %2282 = vmatmul.mubr.f32.gmra.mrb[0].mxu0 %v873
    %v2283 = vpop.f32.mrb[0].mxu0
    %v2284 = vadd.f32 0.0, %v2283
    %v2285 = vpop.f32.mrb[0].mxu0
    %2286 = vmatprep.mubr.f32.mxu0 0.0
    %2287 = vmatmul.mubr.f32.gmra.mrb[0].mxu0 %v876
    %v2288 = vpop.f32.mrb[0].mxu0
    %v2289 = vadd.f32 0.0, %v2288
    %v2290 = vpop.f32.mrb[0].mxu0
    %2291 = vmatprep.mubr.f32.mxu0 0.0
    %2292 = vmatmul.mubr.f32.gmra.mrb[0].mxu0 %v879
    %v2293 = vpop.f32.mrb[0].mxu0
    %v2294 = vadd.f32 0.0, %v2293
    %v2295 = vpop.f32.mrb[0].mxu0
    %2296 = vdwg.mxu0
    %v2297 = vadd.f32 %v2202, %v2284
    %v2298 = vadd.f32 %v2203, %v2289
    %v2299 = vadd.f32 %v2204, %v2294
    %v2300 = vtanh.pop %v2297
    %v2301 = vtanh.pop %v2298
    %v2302 = vtanh.pop %v2299
    %v2303 = vld [vmem:[%s2] sm:$0xff]
    %v2304 = vld [vmem:[%s2 + $0x8] sm:$0xff]
    %v2305 = vld [vmem:[%s2 + $0x10] sm:$0xff]
    %v2306 = vld [vmem:[%s2 + $0x18] sm:$0xff]
    %v2307 = vld [vmem:[%s2 + $0x20] sm:$0xff]
    %v2308 = vld [vmem:[%s2 + $0x28] sm:$0xff]
    %v2309 = vld [vmem:[%s2 + $0x30] sm:$0xff]
    %v2310 = vld [vmem:[%s2 + $0x38] sm:$0xff]
    %v2311 = vld [vmem:[%s2 + $0x40] sm:$0xff]
    %vm2312 = vcmp.gt.f32.partialorder %v2303, 0.0
    %vm2313 = vcmp.gt.f32.partialorder %v2304, 0.0
    %vm2314 = vcmp.gt.f32.partialorder %v2305, 0.0
    %vm2315 = vcmp.gt.f32.partialorder %v2306, 0.0
    %vm2316 = vcmp.gt.f32.partialorder %v2307, 0.0
    %vm2317 = vcmp.gt.f32.partialorder %v2308, 0.0
    %vm2318 = vcmp.gt.f32.partialorder %v2309, 0.0
    %vm2319 = vcmp.gt.f32.partialorder %v2310, 0.0
    %vm2320 = vcmp.gt.f32.partialorder %v2311, 0.0
    %v2321 = vsel %vm2312, 1, 0
    %v2322 = vsel %vm2313, 1, 0
    %v2323 = vsel %vm2314, 1, 0
    %v2324 = vsel %vm2315, 1, 0
    %v2325 = vsel %vm2316, 1, 0
    %v2326 = vsel %vm2317, 1, 0
    %v2327 = vsel %vm2318, 1, 0
    %v2328 = vsel %vm2319, 1, 0
    %v2329 = vsel %vm2320, 1, 0
    %2330 = vset.pattern.permute.xlu0 0
    %2331 = vperm.xlu0 %2330, %v2321
    %v2332 = vpop.permute.xlu0 %2331
    %2333 = vset.pattern.permute.xlu0 0
    %2334 = vperm.xlu0 %2333, %v2322
    %v2335 = vpop.permute.xlu0 %2334
    %2336 = vset.pattern.permute.xlu0 0
    %2337 = vperm.xlu0 %2336, %v2323
    %v2338 = vpop.permute.xlu0 %2337
    %2339 = vset.pattern.permute.xlu0 0
    %2340 = vperm.xlu0 %2339, %v2324
    %v2341 = vpop.permute.xlu0 %2340
    %2342 = vset.pattern.permute.xlu0 0
    %2343 = vperm.xlu0 %2342, %v2325
    %v2344 = vpop.permute.xlu0 %2343
    %2345 = vset.pattern.permute.xlu0 0
    %2346 = vperm.xlu0 %2345, %v2326
    %v2347 = vpop.permute.xlu0 %2346
    %2348 = vset.pattern.permute.xlu0 0
    %2349 = vperm.xlu0 %2348, %v2327
    %v2350 = vpop.permute.xlu0 %2349
    %2351 = vset.pattern.permute.xlu0 0
    %2352 = vperm.xlu0 %2351, %v2328
    %v2353 = vpop.permute.xlu0 %2352
    %2354 = vset.pattern.permute.xlu0 0
    %2355 = vperm.xlu0 %2354, %v2329
    %v2356 = vpop.permute.xlu0 %2355
    %vm2357 = vcmp.eq.s32.totalorder %v2332, 1
    %vm2358 = vcmp.eq.s32.totalorder %v2335, 1
    %vm2359 = vcmp.eq.s32.totalorder %v2338, 1
    %vm2360 = vcmp.eq.s32.totalorder %v2341, 1
    %vm2361 = vcmp.eq.s32.totalorder %v2344, 1
    %vm2362 = vcmp.eq.s32.totalorder %v2347, 1
    %vm2363 = vcmp.eq.s32.totalorder %v2350, 1
    %vm2364 = vcmp.eq.s32.totalorder %v2353, 1
    %vm2365 = vcmp.eq.s32.totalorder %v2356, 1
    %v2366 = vsel %vm2357, %v2300, -1e+30
    %v2367 = vsel %vm2358, %v2301, -1e+30
    %v2368 = vsel %vm2359, %v2302, -1e+30
    %v2369 = vsel %vm2360, %v2300, -1e+30
    %v2370 = vsel %vm2361, %v2301, -1e+30
    %v2371 = vsel %vm2362, %v2302, -1e+30
    %v2372 = vsel %vm2363, %v2300, -1e+30
    %v2373 = vsel %vm2364, %v2301, -1e+30
    %v2374 = vsel %vm2365, %v2302, -1e+30
    %v2375 = vsel %vm1666, %v2366, -inf
    %v2376 = vsel %vm1666, %v2367, -inf
    %v2377 = vsel %vm1666, %v2368, -inf
    %v2378 = vmax.f32 %v2375, %v2377
    %v2379 = vmax.f32 %v2378, %v2376
    %v2380 = vrot.slane %v2379, 4
    %v2381 = vmax.f32 %v2379, %v2380
    %v2382 = vrot.slane %v2381, 2
    %v2383 = vmax.f32 %v2381, %v2382
    %v2384 = vrot.slane %v2383, 1
    %v2385 = vmax.f32 %v2383, %v2384
    %v2386 = vsel %vm1666, %v2369, -inf
    %v2387 = vsel %vm1666, %v2370, -inf
    %v2388 = vsel %vm1666, %v2371, -inf
    %v2389 = vmax.f32 %v2386, %v2388
    %v2390 = vmax.f32 %v2389, %v2387
    %v2391 = vrot.slane %v2390, 4
    %v2392 = vmax.f32 %v2390, %v2391
    %v2393 = vrot.slane %v2392, 2
    %v2394 = vmax.f32 %v2392, %v2393
    %v2395 = vrot.slane %v2394, 1
    %v2396 = vmax.f32 %v2394, %v2395
    %v2397 = vsel %vm1666, %v2372, -inf
    %v2398 = vsel %vm1666, %v2373, -inf
    %v2399 = vsel %vm1666, %v2374, -inf
    %v2400 = vmax.f32 %v2397, %v2399
    %v2401 = vmax.f32 %v2400, %v2398
    %v2402 = vrot.slane %v2401, 4
    %v2403 = vmax.f32 %v2401, %v2402
    %v2404 = vrot.slane %v2403, 2
    %v2405 = vmax.f32 %v2403, %v2404
    %v2406 = vrot.slane %v2405, 1
    %v2407 = vmax.f32 %v2405, %v2406
    %vm2408 = vcmask 7168
    %v2409 = vsel %vm2408, %v2303, 0.0
    %v2410 = vsel %vm2408, %v2304, 0.0
    %v2411 = vadd.f32 %v2409, %v2410
    %v2412 = vsel %vm2408, %v2305, 0.0
    %v2413 = vadd.f32 %v2411, %v2412
    %v2414 = vrot.slane %v2413, 4
    %v2415 = vadd.f32 %v2413, %v2414
    %v2416 = vrot.slane %v2415, 2
    %v2417 = vadd.f32 %v2415, %v2416
    %v2418 = vrot.slane %v2417, 1
    %v2419 = vadd.f32 %v2417, %v2418
    %v2420 = vsel %vm2408, %v2306, 0.0
    %v2421 = vsel %vm2408, %v2307, 0.0
    %v2422 = vadd.f32 %v2420, %v2421
    %v2423 = vsel %vm2408, %v2308, 0.0
    %v2424 = vadd.f32 %v2422, %v2423
    %v2425 = vrot.slane %v2424, 4
    %v2426 = vadd.f32 %v2424, %v2425
    %v2427 = vrot.slane %v2426, 2
    %v2428 = vadd.f32 %v2426, %v2427
    %v2429 = vrot.slane %v2428, 1
    %v2430 = vadd.f32 %v2428, %v2429
    %v2431 = vsel %vm2408, %v2309, 0.0
    %v2432 = vsel %vm2408, %v2310, 0.0
    %v2433 = vadd.f32 %v2431, %v2432
    %v2434 = vsel %vm2408, %v2311, 0.0
    %v2435 = vadd.f32 %v2433, %v2434
    %v2436 = vrot.slane %v2435, 4
    %v2437 = vadd.f32 %v2435, %v2436
    %v2438 = vrot.slane %v2437, 2
    %v2439 = vadd.f32 %v2437, %v2438
    %v2440 = vrot.slane %v2439, 1
    %v2441 = vadd.f32 %v2439, %v2440
    %vm2442 = vcmp.gt.f32.partialorder %v2419, 0.0
    %vm2443 = vcmp.gt.f32.partialorder %v2430, 0.0
    %vm2444 = vcmp.gt.f32.partialorder %v2441, 0.0
    %v2445 = vsel %vm2442, 1, 0
    %v2446 = vsel %vm2443, 1, 0
    %v2447 = vsel %vm2444, 1, 0
    %2448 = vset.pattern.permute.xlu0 0
    %2449 = vperm.xlu0 %2448, %v2445
    %v2450 = vpop.permute.xlu0 %2449
    %2451 = vset.pattern.permute.xlu0 0
    %2452 = vperm.xlu0 %2451, %v2446
    %v2453 = vpop.permute.xlu0 %2452
    %2454 = vset.pattern.permute.xlu0 0
    %2455 = vperm.xlu0 %2454, %v2447
    %v2456 = vpop.permute.xlu0 %2455
    %vm2457 = vcmp.eq.s32.totalorder %v2450, 1
    %vm2458 = vcmp.eq.s32.totalorder %v2453, 1
    %vm2459 = vcmp.eq.s32.totalorder %v2456, 1
    %v2460 = vsel %vm2457, %v2385, 0.0
    %v2461 = vsel %vm2458, %v2396, 0.0
    %v2462 = vsel %vm2459, %v2407, 0.0
    %vm2466 = vcmask 1041409
    %v2467 = vsel %vm2466, %v2461, %v2460
    %vm2468 = vcmask 1042434
    %v2469 = vsel %vm2468, %v2462, %v2467
    %vm2471 = vcmask 518144
    %2472 = vst.msk [vmem:[#allocation11] sm:$0x7] %vm2471, %v2469
    // Predicated region
    $region74: #{tpu_custom_call.1} parent=1 // pred_check
      _
    $region75: #{tpu_custom_call.1} parent=1 // pred_check_branch
      %2474 = sbr.rel (0) target = $region77
    $region76: #{tpu_custom_call.1} parent=1 // pred_region
      %s2476 = ssub.s32 64, 64
      %2477 = vsyncadd [#allocation4], %s2476
      %s2479 = sshll.u32 [#allocation11], 4
      %s2480 = int_to_ptr.vmem [resolvable:$true] %s2479
      %2482 = dma.vmem_to_hbm [thread:$0]  %s2480, 64, %s13, [#allocation4]
    $region77: #{tpu_custom_call.1} parent=1 // pred_fallthru
      _
    // Predicated region
    $region78: #{tpu_custom_call.1} parent=1 // pred_check
      _
    $region79: #{tpu_custom_call.1} parent=1 // pred_check_branch
      %2484 = sbr.rel (0) target = $region81
    $region80: #{tpu_custom_call.1} parent=1 // pred_region
      %2485 = dma.done [#allocation4], 64
    $region81: #{tpu_custom_call.1} parent=1 // pred_fallthru
      _
    %2486 = vsyncpa [#allocation3], 1
    %2487 = vsyncpa [#allocation6], 1
    %2488 = vsyncpa [#allocation9], 1
    %2489 = vsyncpa [#allocation4], 1

</llo_original>
